<compile_context>
chip_gen: v6e
topology: v6e:2x2x1
jax: 0.10.0
libtpu: 0.0.40
codegen_flags: <defaults>
</compile_context>

<pallas_src>
import functools

import jax
import jax.numpy as jnp
from jax.experimental import pallas as pl
from jax.experimental.pallas import tpu as pltpu

LANE = 128


def _round_up(n, m):
    return (n + m - 1) // m * m


# ----------------------------------------------------------------------------
# Pallas kernel: whole VAE forward for one batch tile.
# ----------------------------------------------------------------------------
def vae_kernel(
    x_ref, eps_ref,
    w1_ref, b1_ref, w2_ref, b2_ref,
    whead_ref, bhead_ref,
    w3_ref, b3_ref, w4_ref, b4_ref,
    wd_ref, bd_ref,
    head_out_ref, recon_ref,
    *, latent_dim,
):
    bf16 = jnp.bfloat16
    f32 = jnp.float32
    L = latent_dim

    x = x_ref[...]  # [TB, input_dim] bf16

    # Encoder: fc1 -> ReLU -> fc2 -> ReLU  (bf16 MXU, f32 accumulate)
    h1 = jnp.dot(x, w1_ref[...], preferred_element_type=f32) + b1_ref[...]
    h1 = jnp.maximum(h1, 0.0).astype(bf16)
    h2 = jnp.dot(h1, w2_ref[...], preferred_element_type=f32) + b2_ref[...]
    h2 = jnp.maximum(h2, 0.0).astype(bf16)

    # Fused latent + ranking heads: columns are [mu | logvar | logit | 0-pad].
    head = jnp.dot(h2, whead_ref[...], preferred_element_type=f32) + bhead_ref[...]

    mu = head[:, :L]
    logvar = head[:, L:2 * L]

    # Reparameterize: z = mu + eps * exp(0.5 * logvar)
    z = mu + eps_ref[...] * jnp.exp(0.5 * logvar)

    # Decoder: fc3 -> ReLU -> fc4 -> ReLU -> decoder
    d1 = jnp.dot(z.astype(bf16), w3_ref[...], preferred_element_type=f32) + b3_ref[...]
    d1 = jnp.maximum(d1, 0.0).astype(bf16)
    d2 = jnp.dot(d1, w4_ref[...], preferred_element_type=f32) + b4_ref[...]
    d2 = jnp.maximum(d2, 0.0).astype(bf16)
    recon_ref[...] = jnp.dot(d2, wd_ref[...], preferred_element_type=f32) + bd_ref[...]

    # Lane-dense packed head output: [0:L)=mu, [L:2L)=logvar, [2L]=sigmoid(logit),
    # remaining (zero-weight-padded) columns stay 0.
    col = jax.lax.broadcasted_iota(jnp.int32, head.shape, 1)
    head_out_ref[...] = jnp.where(col == 2 * L, jax.nn.sigmoid(head), head)


# ----------------------------------------------------------------------------
# Wrapper: parameter fusion/padding, batch tiling, output unpacking.
# ----------------------------------------------------------------------------
def vae_forward(x, eps, params, *, block_b=128):
    """x: [B, input_dim] f32; eps: [B, latent_dim] f32."""
    B, input_dim = x.shape
    latent_dim = eps.shape[1]
    L = latent_dim
    bf16 = jnp.bfloat16

    head_pad = _round_up(2 * L + 1, LANE)
    recon_pad = _round_up(input_dim, LANE)

    # Fuse mu / logvar / ranking heads (all consume h2) into one padded weight.
    whead = jnp.concatenate([params["wmu"], params["wlv"], params["wr"]], axis=1)
    whead = jnp.pad(whead, ((0, 0), (0, head_pad - (2 * L + 1))))
    bhead = jnp.concatenate([params["bmu"], params["blv"], params["br"]], axis=1)
    bhead = jnp.pad(bhead, ((0, 0), (0, head_pad - (2 * L + 1))))

    # Pad decoder output columns to a lane-dense multiple of 128.
    wd = jnp.pad(params["wd"], ((0, 0), (0, recon_pad - input_dim)))
    bd = jnp.pad(params["bd"], ((0, 0), (0, recon_pad - input_dim)))

    # Pad batch to a multiple of the tile.
    pad_b = _round_up(B, block_b)
    if pad_b != B:
        x = jnp.pad(x, ((0, pad_b - B), (0, 0)))
        eps = jnp.pad(eps, ((0, pad_b - B), (0, 0)))
    x = x.astype(bf16)
    n_tiles = pad_b // block_b

    ordered = [
        x, eps,
        params["w1"].astype(bf16), params["b1"],
        params["w2"].astype(bf16), params["b2"],
        whead.astype(bf16), bhead,
        params["w3"].astype(bf16), params["b3"],
        params["w4"].astype(bf16), params["b4"],
        wd.astype(bf16), bd,
    ]

    def tile_spec(feat):
        return pl.BlockSpec((block_b, feat), lambda i: (i, 0))

    def resident_spec(arr):
        # Full-array block, constant index_map -> stays in VMEM across steps.
        return pl.BlockSpec(arr.shape, lambda i: (0, 0))

    in_specs = [tile_spec(input_dim), tile_spec(latent_dim)] + [
        resident_spec(a) for a in ordered[2:]
    ]
    out_shape = (
        jax.ShapeDtypeStruct((pad_b, head_pad), jnp.float32),   # mu|logvar|rank slab
        jax.ShapeDtypeStruct((pad_b, recon_pad), jnp.float32),  # padded recon
    )
    out_specs = (tile_spec(head_pad), tile_spec(recon_pad))

    head_slab, recon_slab = pl.pallas_call(
        functools.partial(vae_kernel, latent_dim=latent_dim),
        out_shape=out_shape,
        grid=(n_tiles,),
        in_specs=in_specs,
        out_specs=out_specs,
        compiler_params=pltpu.CompilerParams(
            dimension_semantics=("parallel",),
            vmem_limit_bytes=32 * 1024 * 1024,
        ),
    )(*ordered)

    mu = head_slab[:B, :L]
    logvar = head_slab[:B, L:2 * L]
    rank = head_slab[:B, 2 * L:2 * L + 1]
    recon = recon_slab[:B, :input_dim]
    return rank, recon, mu, logvar


# ----------------------------------------------------------------------------
# Deterministic parameter init (PyTorch nn.Linear-style uniform(+-1/sqrt(fan_in)))
# Weights stored pre-transposed: [in_features, out_features].
# ----------------------------------------------------------------------------
def init_linear(key, in_f, out_f):
    kw, kb = jax.random.split(key)
    bound = 1.0 / jnp.sqrt(float(in_f))
    w = jax.random.uniform(kw, (in_f, out_f), jnp.float32, -bound, bound)
    b = jax.random.uniform(kb, (1, out_f), jnp.float32, -bound, bound)
    return w, b


def init_vae_params(key, input_dim, latent_dim):
    keys = jax.random.split(key, 8)
    p = {}
    p["w1"], p["b1"] = init_linear(keys[0], input_dim, 256)
    p["w2"], p["b2"] = init_linear(keys[1], 256, 128)
    p["wmu"], p["bmu"] = init_linear(keys[2], 128, latent_dim)
    p["wlv"], p["blv"] = init_linear(keys[3], 128, latent_dim)
    p["w3"], p["b3"] = init_linear(keys[4], latent_dim, 128)
    p["w4"], p["b4"] = init_linear(keys[5], 128, 256)
    p["wd"], p["bd"] = init_linear(keys[6], 256, input_dim)
    p["wr"], p["br"] = init_linear(keys[7], 128, 1)
    return p


# Pure-JAX reference with matched bf16-operand / f32-accumulate matmul math.
def vae_forward_ref(x, eps, p):
    bf16 = jnp.bfloat16
    f32 = jnp.float32

    def dot(a, w):
        return jnp.dot(a.astype(bf16), w.astype(bf16), preferred_element_type=f32)

    h1 = jnp.maximum(dot(x, p["w1"]) + p["b1"], 0.0)
    h2 = jnp.maximum(dot(h1, p["w2"]) + p["b2"], 0.0)
    mu = dot(h2, p["wmu"]) + p["bmu"]
    logvar = dot(h2, p["wlv"]) + p["blv"]
    z = mu + eps * jnp.exp(0.5 * logvar)
    d1 = jnp.maximum(dot(z, p["w3"]) + p["b3"], 0.0)
    d2 = jnp.maximum(dot(d1, p["w4"]) + p["b4"], 0.0)
    recon = dot(d2, p["wd"]) + p["bd"]
    rank = jax.nn.sigmoid(dot(h2, p["wr"]) + p["br"])
    return rank, recon, mu, logvar


if __name__ == "__main__":
    B = 256            # 2 batch tiles of 128 -> exercises the pipelined grid
    input_dim = 32
    latent_dim = 8
    beta = 0.5         # part of the module config; only used in the loss, not forward

    key = jax.random.PRNGKey(0)
    k_param, k_x, k_eps = jax.random.split(key, 3)

    params = init_vae_params(k_param, input_dim, latent_dim)
    x = jax.random.normal(k_x, (B, input_dim), jnp.float32)
    eps = jax.random.normal(k_eps, (B, latent_dim), jnp.float32)

    fwd = jax.jit(functools.partial(vae_forward, block_b=128))
    rank, recon, mu, logvar = jax.block_until_ready(fwd(x, eps, params))

    # sanity check against pure-JAX reference (same bf16 matmul quantization)
    r_rank, r_recon, r_mu, r_logvar = vae_forward_ref(x, eps, params)
    assert rank.shape == (B, 1) and recon.shape == (B, input_dim)
    assert mu.shape == (B, latent_dim) and logvar.shape == (B, latent_dim)
    assert jnp.allclose(rank, r_rank, atol=1e-3, rtol=1e-3)
    assert jnp.allclose(mu, r_mu, atol=1e-3, rtol=1e-3)
    assert jnp.allclose(logvar, r_logvar, atol=1e-3, rtol=1e-3)
    assert jnp.allclose(recon, r_recon, atol=2e-3, rtol=2e-3)

    print("KERNEL_OK")
</pallas_src>

<mosaic_0001>
module attributes {stable_mosaic.version = 11 : i64} {
  func.func @vae_kernel(%arg0: i32, %arg1: memref<128x32xbf16, #tpu.memory_space<vmem>>, %arg2: memref<128x8xf32, #tpu.memory_space<vmem>>, %arg3: memref<32x256xbf16, #tpu.memory_space<vmem>>, %arg4: memref<1x256xf32, #tpu.memory_space<vmem>>, %arg5: memref<256x128xbf16, #tpu.memory_space<vmem>>, %arg6: memref<1x128xf32, #tpu.memory_space<vmem>>, %arg7: memref<128x128xbf16, #tpu.memory_space<vmem>>, %arg8: memref<1x128xf32, #tpu.memory_space<vmem>>, %arg9: memref<8x128xbf16, #tpu.memory_space<vmem>>, %arg10: memref<1x128xf32, #tpu.memory_space<vmem>>, %arg11: memref<128x256xbf16, #tpu.memory_space<vmem>>, %arg12: memref<1x256xf32, #tpu.memory_space<vmem>>, %arg13: memref<256x128xbf16, #tpu.memory_space<vmem>>, %arg14: memref<1x128xf32, #tpu.memory_space<vmem>>, %arg15: memref<128x128xf32, #tpu.memory_space<vmem>>, %arg16: memref<128x128xf32, #tpu.memory_space<vmem>>) attributes {dimension_semantics = [#tpu.dimension_semantics<parallel>], iteration_bounds = array<i64: 2>, scalar_prefetch = 0 : i64, scratch_operands = 0 : i64, tpu.core_type = #tpu.core_type<tc>, window_params = [{transform_indices = @transform_0, window_bounds = array<i64: 128, 32>}, {transform_indices = @transform_1, window_bounds = array<i64: 128, 8>}, {pipeline_mode = #tpu.pipeline_mode<synchronous>, transform_indices = @transform_2, window_bounds = array<i64: 32, 256>}, {pipeline_mode = #tpu.pipeline_mode<synchronous>, transform_indices = @transform_3, window_bounds = array<i64: 1, 256>}, {pipeline_mode = #tpu.pipeline_mode<synchronous>, transform_indices = @transform_4, window_bounds = array<i64: 256, 128>}, {pipeline_mode = #tpu.pipeline_mode<synchronous>, transform_indices = @transform_5, window_bounds = array<i64: 1, 128>}, {pipeline_mode = #tpu.pipeline_mode<synchronous>, transform_indices = @transform_6, window_bounds = array<i64: 128, 128>}, {pipeline_mode = #tpu.pipeline_mode<synchronous>, transform_indices = @transform_7, window_bounds = array<i64: 1, 128>}, {pipeline_mode = #tpu.pipeline_mode<synchronous>, transform_indices = @transform_8, window_bounds = array<i64: 8, 128>}, {pipeline_mode = #tpu.pipeline_mode<synchronous>, transform_indices = @transform_9, window_bounds = array<i64: 1, 128>}, {pipeline_mode = #tpu.pipeline_mode<synchronous>, transform_indices = @transform_10, window_bounds = array<i64: 128, 256>}, {pipeline_mode = #tpu.pipeline_mode<synchronous>, transform_indices = @transform_11, window_bounds = array<i64: 1, 256>}, {pipeline_mode = #tpu.pipeline_mode<synchronous>, transform_indices = @transform_12, window_bounds = array<i64: 256, 128>}, {pipeline_mode = #tpu.pipeline_mode<synchronous>, transform_indices = @transform_13, window_bounds = array<i64: 1, 128>}, {transform_indices = @transform_14, window_bounds = array<i64: 128, 128>}, {transform_indices = @transform_15, window_bounds = array<i64: 128, 128>}]} {
    %c0 = arith.constant 0 : index
    %c0_0 = arith.constant 0 : index
    %0 = vector.load %arg1[%c0, %c0_0] : memref<128x32xbf16, #tpu.memory_space<vmem>>, vector<128x32xbf16>
    %c0_1 = arith.constant 0 : index
    %c0_2 = arith.constant 0 : index
    %1 = vector.load %arg3[%c0_1, %c0_2] : memref<32x256xbf16, #tpu.memory_space<vmem>>, vector<32x256xbf16>
    %cst = arith.constant dense<0.000000e+00> : vector<128x256xf32>
    %2 = tpu.matmul %0, %1, %cst {dimension_numbers = #tpu.dot_dimension_numbers<[1], [0], [0], [1], [0, 0, 1, 1], [], []>} : vector<128x32xbf16>, vector<32x256xbf16>, vector<128x256xf32> -> vector<128x256xf32>
    %c0_3 = arith.constant 0 : index
    %c0_4 = arith.constant 0 : index
    %3 = vector.load %arg4[%c0_3, %c0_4] : memref<1x256xf32, #tpu.memory_space<vmem>>, vector<1x256xf32>
    %4 = vector.broadcast %3 : vector<1x256xf32> to vector<128x256xf32>
    %5 = arith.addf %2, %4 : vector<128x256xf32>
    %cst_5 = arith.constant 0.000000e+00 : f32
    %6 = vector.broadcast %cst_5 : f32 to vector<128x256xf32>
    %7 = arith.maximumf %5, %6 : vector<128x256xf32>
    %8 = arith.truncf %7 : vector<128x256xf32> to vector<128x256xbf16>
    %c0_6 = arith.constant 0 : index
    %c0_7 = arith.constant 0 : index
    %9 = vector.load %arg5[%c0_6, %c0_7] : memref<256x128xbf16, #tpu.memory_space<vmem>>, vector<256x128xbf16>
    %cst_8 = arith.constant dense<0.000000e+00> : vector<128x128xf32>
    %10 = tpu.matmul %8, %9, %cst_8 {dimension_numbers = #tpu.dot_dimension_numbers<[1], [0], [0], [1], [0, 0, 1, 1], [], []>} : vector<128x256xbf16>, vector<256x128xbf16>, vector<128x128xf32> -> vector<128x128xf32>
    %c0_9 = arith.constant 0 : index
    %c0_10 = arith.constant 0 : index
    %11 = vector.load %arg6[%c0_9, %c0_10] : memref<1x128xf32, #tpu.memory_space<vmem>>, vector<1x128xf32>
    %12 = vector.broadcast %11 : vector<1x128xf32> to vector<128x128xf32>
    %13 = arith.addf %10, %12 : vector<128x128xf32>
    %cst_11 = arith.constant 0.000000e+00 : f32
    %14 = vector.broadcast %cst_11 : f32 to vector<128x128xf32>
    %15 = arith.maximumf %13, %14 : vector<128x128xf32>
    %16 = arith.truncf %15 : vector<128x128xf32> to vector<128x128xbf16>
    %c0_12 = arith.constant 0 : index
    %c0_13 = arith.constant 0 : index
    %17 = vector.load %arg7[%c0_12, %c0_13] : memref<128x128xbf16, #tpu.memory_space<vmem>>, vector<128x128xbf16>
    %cst_14 = arith.constant dense<0.000000e+00> : vector<128x128xf32>
    %18 = tpu.matmul %16, %17, %cst_14 {dimension_numbers = #tpu.dot_dimension_numbers<[1], [0], [0], [1], [0, 0, 1, 1], [], []>} : vector<128x128xbf16>, vector<128x128xbf16>, vector<128x128xf32> -> vector<128x128xf32>
    %c0_15 = arith.constant 0 : index
    %c0_16 = arith.constant 0 : index
    %19 = vector.load %arg8[%c0_15, %c0_16] : memref<1x128xf32, #tpu.memory_space<vmem>>, vector<1x128xf32>
    %20 = vector.broadcast %19 : vector<1x128xf32> to vector<128x128xf32>
    %21 = arith.addf %18, %20 : vector<128x128xf32>
    %22 = vector.extract_strided_slice %21 {offsets = [0, 0], sizes = [128, 8], strides = [1, 1]} : vector<128x128xf32> to vector<128x8xf32>
    %23 = vector.extract_strided_slice %21 {offsets = [0, 8], sizes = [128, 8], strides = [1, 1]} : vector<128x128xf32> to vector<128x8xf32>
    %c0_17 = arith.constant 0 : index
    %c0_18 = arith.constant 0 : index
    %24 = vector.load %arg2[%c0_17, %c0_18] : memref<128x8xf32, #tpu.memory_space<vmem>>, vector<128x8xf32>
    %cst_19 = arith.constant 5.000000e-01 : f32
    %25 = vector.broadcast %cst_19 : f32 to vector<128x8xf32>
    %26 = arith.mulf %25, %23 : vector<128x8xf32>
    %27 = math.exp %26 : vector<128x8xf32>
    %28 = arith.mulf %24, %27 : vector<128x8xf32>
    %29 = arith.addf %22, %28 : vector<128x8xf32>
    %30 = arith.truncf %29 : vector<128x8xf32> to vector<128x8xbf16>
    %c0_20 = arith.constant 0 : index
    %c0_21 = arith.constant 0 : index
    %31 = vector.load %arg9[%c0_20, %c0_21] : memref<8x128xbf16, #tpu.memory_space<vmem>>, vector<8x128xbf16>
    %cst_22 = arith.constant dense<0.000000e+00> : vector<128x128xf32>
    %32 = tpu.matmul %30, %31, %cst_22 {dimension_numbers = #tpu.dot_dimension_numbers<[1], [0], [0], [1], [0, 0, 1, 1], [], []>} : vector<128x8xbf16>, vector<8x128xbf16>, vector<128x128xf32> -> vector<128x128xf32>
    %c0_23 = arith.constant 0 : index
    %c0_24 = arith.constant 0 : index
    %33 = vector.load %arg10[%c0_23, %c0_24] : memref<1x128xf32, #tpu.memory_space<vmem>>, vector<1x128xf32>
    %34 = vector.broadcast %33 : vector<1x128xf32> to vector<128x128xf32>
    %35 = arith.addf %32, %34 : vector<128x128xf32>
    %cst_25 = arith.constant 0.000000e+00 : f32
    %36 = vector.broadcast %cst_25 : f32 to vector<128x128xf32>
    %37 = arith.maximumf %35, %36 : vector<128x128xf32>
    %38 = arith.truncf %37 : vector<128x128xf32> to vector<128x128xbf16>
    %c0_26 = arith.constant 0 : index
    %c0_27 = arith.constant 0 : index
    %39 = vector.load %arg11[%c0_26, %c0_27] : memref<128x256xbf16, #tpu.memory_space<vmem>>, vector<128x256xbf16>
    %cst_28 = arith.constant dense<0.000000e+00> : vector<128x256xf32>
    %40 = tpu.matmul %38, %39, %cst_28 {dimension_numbers = #tpu.dot_dimension_numbers<[1], [0], [0], [1], [0, 0, 1, 1], [], []>} : vector<128x128xbf16>, vector<128x256xbf16>, vector<128x256xf32> -> vector<128x256xf32>
    %c0_29 = arith.constant 0 : index
    %c0_30 = arith.constant 0 : index
    %41 = vector.load %arg12[%c0_29, %c0_30] : memref<1x256xf32, #tpu.memory_space<vmem>>, vector<1x256xf32>
    %42 = vector.broadcast %41 : vector<1x256xf32> to vector<128x256xf32>
    %43 = arith.addf %40, %42 : vector<128x256xf32>
    %cst_31 = arith.constant 0.000000e+00 : f32
    %44 = vector.broadcast %cst_31 : f32 to vector<128x256xf32>
    %45 = arith.maximumf %43, %44 : vector<128x256xf32>
    %46 = arith.truncf %45 : vector<128x256xf32> to vector<128x256xbf16>
    %c0_32 = arith.constant 0 : index
    %c0_33 = arith.constant 0 : index
    %47 = vector.load %arg13[%c0_32, %c0_33] : memref<256x128xbf16, #tpu.memory_space<vmem>>, vector<256x128xbf16>
    %cst_34 = arith.constant dense<0.000000e+00> : vector<128x128xf32>
    %48 = tpu.matmul %46, %47, %cst_34 {dimension_numbers = #tpu.dot_dimension_numbers<[1], [0], [0], [1], [0, 0, 1, 1], [], []>} : vector<128x256xbf16>, vector<256x128xbf16>, vector<128x128xf32> -> vector<128x128xf32>
    %c0_35 = arith.constant 0 : index
    %c0_36 = arith.constant 0 : index
    %49 = vector.load %arg14[%c0_35, %c0_36] : memref<1x128xf32, #tpu.memory_space<vmem>>, vector<1x128xf32>
    %50 = vector.broadcast %49 : vector<1x128xf32> to vector<128x128xf32>
    %51 = arith.addf %48, %50 : vector<128x128xf32>
    %c0_37 = arith.constant 0 : index
    %c0_38 = arith.constant 0 : index
    %52 = vector.load %arg16[%c0_37, %c0_38] : memref<128x128xf32, #tpu.memory_space<vmem>>, vector<128x128xf32>
    tpu.vector_store %arg16[%c0_37, %c0_38], %51 {strides = array<i32>} : memref<128x128xf32, #tpu.memory_space<vmem>>, vector<128x128xf32>,
    %53 = tpu.iota {dimensions = array<i32: 1>} : vector<128x128xi32>
    %c16_i32 = arith.constant 16 : i32
    %54 = vector.broadcast %c16_i32 : i32 to vector<128x128xi32>
    %55 = arith.cmpi eq, %53, %54 : vector<128x128xi32>
    %56 = arith.negf %21 : vector<128x128xf32>
    %57 = math.exp %56 : vector<128x128xf32>
    %cst_39 = arith.constant 1.000000e+00 : f32
    %58 = vector.broadcast %cst_39 : f32 to vector<128x128xf32>
    %59 = arith.addf %58, %57 : vector<128x128xf32>
    %60 = arith.divf %58, %59 : vector<128x128xf32>
    %61 = arith.select %55, %60, %21 : vector<128x128xi1>, vector<128x128xf32>
    %c0_40 = arith.constant 0 : index
    %c0_41 = arith.constant 0 : index
    %62 = vector.load %arg15[%c0_40, %c0_41] : memref<128x128xf32, #tpu.memory_space<vmem>>, vector<128x128xf32>
    tpu.vector_store %arg15[%c0_40, %c0_41], %61 {strides = array<i32>} : memref<128x128xf32, #tpu.memory_space<vmem>>, vector<128x128xf32>,
    return
  }
  func.func @transform_0(%arg0: i32) -> (i32, i32) {
    %c0_i32 = arith.constant 0 : i32
    %c0_i32_0 = arith.constant 0 : i32
    return %arg0, %c0_i32 : i32, i32
  }
  func.func @transform_1(%arg0: i32) -> (i32, i32) {
    %c0_i32 = arith.constant 0 : i32
    %c0_i32_0 = arith.constant 0 : i32
    return %arg0, %c0_i32 : i32, i32
  }
  func.func @transform_2(%arg0: i32) -> (i32, i32) {
    %c0_i32 = arith.constant 0 : i32
    %c0_i32_0 = arith.constant 0 : i32
    %c0_i32_1 = arith.constant 0 : i32
    return %c0_i32, %c0_i32_0 : i32, i32
  }
  func.func @transform_3(%arg0: i32) -> (i32, i32) {
    %c0_i32 = arith.constant 0 : i32
    %c0_i32_0 = arith.constant 0 : i32
    %c0_i32_1 = arith.constant 0 : i32
    return %c0_i32, %c0_i32_0 : i32, i32
  }
  func.func @transform_4(%arg0: i32) -> (i32, i32) {
    %c0_i32 = arith.constant 0 : i32
    %c0_i32_0 = arith.constant 0 : i32
    %c0_i32_1 = arith.constant 0 : i32
    return %c0_i32, %c0_i32_0 : i32, i32
  }
  func.func @transform_5(%arg0: i32) -> (i32, i32) {
    %c0_i32 = arith.constant 0 : i32
    %c0_i32_0 = arith.constant 0 : i32
    %c0_i32_1 = arith.constant 0 : i32
    return %c0_i32, %c0_i32_0 : i32, i32
  }
  func.func @transform_6(%arg0: i32) -> (i32, i32) {
    %c0_i32 = arith.constant 0 : i32
    %c0_i32_0 = arith.constant 0 : i32
    %c0_i32_1 = arith.constant 0 : i32
    return %c0_i32, %c0_i32_0 : i32, i32
  }
  func.func @transform_7(%arg0: i32) -> (i32, i32) {
    %c0_i32 = arith.constant 0 : i32
    %c0_i32_0 = arith.constant 0 : i32
    %c0_i32_1 = arith.constant 0 : i32
    return %c0_i32, %c0_i32_0 : i32, i32
  }
  func.func @transform_8(%arg0: i32) -> (i32, i32) {
    %c0_i32 = arith.constant 0 : i32
    %c0_i32_0 = arith.constant 0 : i32
    %c0_i32_1 = arith.constant 0 : i32
    return %c0_i32, %c0_i32_0 : i32, i32
  }
  func.func @transform_9(%arg0: i32) -> (i32, i32) {
    %c0_i32 = arith.constant 0 : i32
    %c0_i32_0 = arith.constant 0 : i32
    %c0_i32_1 = arith.constant 0 : i32
    return %c0_i32, %c0_i32_0 : i32, i32
  }
  func.func @transform_10(%arg0: i32) -> (i32, i32) {
    %c0_i32 = arith.constant 0 : i32
    %c0_i32_0 = arith.constant 0 : i32
    %c0_i32_1 = arith.constant 0 : i32
    return %c0_i32, %c0_i32_0 : i32, i32
  }
  func.func @transform_11(%arg0: i32) -> (i32, i32) {
    %c0_i32 = arith.constant 0 : i32
    %c0_i32_0 = arith.constant 0 : i32
    %c0_i32_1 = arith.constant 0 : i32
    return %c0_i32, %c0_i32_0 : i32, i32
  }
  func.func @transform_12(%arg0: i32) -> (i32, i32) {
    %c0_i32 = arith.constant 0 : i32
    %c0_i32_0 = arith.constant 0 : i32
    %c0_i32_1 = arith.constant 0 : i32
    return %c0_i32, %c0_i32_0 : i32, i32
  }
  func.func @transform_13(%arg0: i32) -> (i32, i32) {
    %c0_i32 = arith.constant 0 : i32
    %c0_i32_0 = arith.constant 0 : i32
    %c0_i32_1 = arith.constant 0 : i32
    return %c0_i32, %c0_i32_0 : i32, i32
  }
  func.func @transform_14(%arg0: i32) -> (i32, i32) {
    %c0_i32 = arith.constant 0 : i32
    %c0_i32_0 = arith.constant 0 : i32
    return %arg0, %c0_i32 : i32, i32
  }
  func.func @transform_15(%arg0: i32) -> (i32, i32) {
    %c0_i32 = arith.constant 0 : i32
    %c0_i32_0 = arith.constant 0 : i32
    return %arg0, %c0_i32 : i32, i32
  }
}

</mosaic_0001>

<llo_original>
// kernel: vae_forward.1
$region0: #{vae_forward.1}
  #allocation0 [shape = 'u32[]', space=smem, size = 0x4, offset = 0x4, fixed_abs, tag = 'smem constant byte address 0x4 - core index']
  #allocation1 [shape = 'u32[144,128]{1,0:T(1,128)}', space=vmem, size = 0x12000, scoped, tag = 'internal scratch']
  %s0 = inlined_call_operand.vmem [shape: bf16[256,32], index: 0, kind: input, shape index: {}]
  %s1 = inlined_call_operand.vmem [shape: f32[256,8], index: 1, kind: input, shape index: {}]
  %s2 = inlined_call_operand.vmem [shape: bf16[32,256], index: 2, kind: input, shape index: {}]
  %s3 = inlined_call_operand.vmem [shape: f32[1,256], index: 3, kind: input, shape index: {}]
  %s4 = inlined_call_operand.vmem [shape: bf16[256,128], index: 4, kind: input, shape index: {}]
  %s5 = inlined_call_operand.vmem [shape: f32[1,128], index: 5, kind: input, shape index: {}]
  %s6 = inlined_call_operand.vmem [shape: bf16[128,128], index: 6, kind: input, shape index: {}]
  %s7 = inlined_call_operand.vmem [shape: f32[1,128], index: 7, kind: input, shape index: {}]
  %s8 = inlined_call_operand.vmem [shape: bf16[8,128], index: 8, kind: input, shape index: {}]
  %s9 = inlined_call_operand.vmem [shape: f32[1,128], index: 9, kind: input, shape index: {}]
  %s10 = inlined_call_operand.vmem [shape: bf16[128,256], index: 10, kind: input, shape index: {}]
  %s11 = inlined_call_operand.vmem [shape: f32[1,256], index: 11, kind: input, shape index: {}]
  %s12 = inlined_call_operand.vmem [shape: bf16[256,128], index: 12, kind: input, shape index: {}]
  %s13 = inlined_call_operand.vmem [shape: f32[1,128], index: 13, kind: input, shape index: {}]
  %s14 = inlined_call_operand.vmem [shape: f32[256,128], index: 14, kind: output, shape index: {0}]
  %s15 = inlined_call_operand.vmem [shape: f32[256,128], index: 15, kind: output, shape index: {1}]
  %16 = xla_tuple %s14, %s15
  %s17 = sld [smem:[#allocation0]]
  $region97: #{vae_forward.1} parent=0
    _
  %s19 = ssub.s32 1, %s17
  %s20 = scalar_select 0, %s19, %s17
  loop: start=0, step=1, limit=4
  $region2: #{vae_forward.1} parent=0 // loop_pre_header
    _
  $region3: #{vae_forward.1} parent=0 // loop_header
    %s22 = sphi 0, %s26
    %p23 = scmp.ge.s32.totalorder %s22, 4
    %s32 = sphi 0, %s34
    %s35 = sphi 0, %s32
    %s36 = sphi 0, %s35
    %s52 = sphi 0, %s36
    %s58 = sphi 0, %s60
    %s61 = sphi 0, %s58
    %s62 = sphi 0, %s61
    %s78 = sphi 0, %s62
    %s82 = sphi 0, %s82
    %s84 = sphi 0, %s82
    %s85 = sphi 0, %s84
    %s99 = sphi 0, %s85
    %s103 = sphi 0, %s103
    %s105 = sphi 0, %s103
    %s106 = sphi 0, %s105
    %s120 = sphi 0, %s106
    %s124 = sphi 0, %s124
    %s126 = sphi 0, %s124
    %s127 = sphi 0, %s126
    %s141 = sphi 0, %s127
    %s145 = sphi 0, %s145
    %s147 = sphi 0, %s145
    %s148 = sphi 0, %s147
    %s162 = sphi 0, %s148
    %s166 = sphi 0, %s166
    %s168 = sphi 0, %s166
    %s169 = sphi 0, %s168
    %s183 = sphi 0, %s169
    %s187 = sphi 0, %s187
    %s189 = sphi 0, %s187
    %s190 = sphi 0, %s189
    %s204 = sphi 0, %s190
    %s208 = sphi 0, %s208
    %s210 = sphi 0, %s208
    %s211 = sphi 0, %s210
    %s225 = sphi 0, %s211
    %s229 = sphi 0, %s229
    %s231 = sphi 0, %s229
    %s232 = sphi 0, %s231
    %s246 = sphi 0, %s232
    %s250 = sphi 0, %s250
    %s252 = sphi 0, %s250
    %s253 = sphi 0, %s252
    %s267 = sphi 0, %s253
    %s271 = sphi 0, %s271
    %s273 = sphi 0, %s271
    %s274 = sphi 0, %s273
    %s288 = sphi 0, %s274
    %s292 = sphi 0, %s292
    %s294 = sphi 0, %s292
    %s295 = sphi 0, %s294
    %s309 = sphi 0, %s295
    %s313 = sphi 0, %s313
    %s315 = sphi 0, %s313
    %s316 = sphi 0, %s315
    %s330 = sphi 0, %s316
    %s336 = sphi 0, %s338
    %s339 = sphi 0, %s336
    %s340 = sphi 0, %s339
    %s356 = sphi 0, %s340
    %s362 = sphi 0, %s364
    %s365 = sphi 0, %s362
    %s366 = sphi 0, %s365
    %s382 = sphi 0, %s366
  $region4: #{vae_forward.1} parent=0 // loop_header_branch
    %25 = sbr.rel (%p23) target = $region8
  $region5: #{vae_forward.1} parent=0 // loop_body
    %s27 = ssub.s32 %s22, 1
    %s28 = ssub.s32 %s22, 2
    %s29 = sadd.s32 %s22, 1
    %s30 = ssub.s32 %s22, %s29
    %p31 = scmp.eq.s32.totalorder %s30, 0
    %s33 = sadd.s32 %s32, 1
    %s34 = scalar_select %p31, %s32, %s33
    %p37 = pneg %p31
    %p38 = scmp.eq.s32.totalorder %s22, 1
    %p39 = por %p37, %p38
    %p40 = scmp.ne.s32.totalorder %s32, %s35
    %p41 = scmp.eq.s32.totalorder %s22, 0
    %p42 = por %p40, %p41
    %p43 = scmp.ne.s32.totalorder %s32, %s35
    %p44 = scmp.eq.s32.totalorder %s27, 1
    %p45 = por %p43, %p44
    %p46 = scmp.ne.s32.totalorder %s35, %s36
    %p47 = scmp.eq.s32.totalorder %s27, 0
    %p48 = por %p46, %p47
    %p49 = scmp.ne.s32.totalorder %s35, %s36
    %p50 = scmp.eq.s32.totalorder %s28, 1
    %p51 = por %p49, %p50
    %p53 = scmp.ne.s32.totalorder %s36, %s52
    %p54 = scmp.eq.s32.totalorder %s28, 0
    %p55 = por %p53, %p54
    %s56 = ssub.s32 %s22, %s29
    %p57 = scmp.eq.s32.totalorder %s56, 0
    %s59 = sadd.s32 %s58, 1
    %s60 = scalar_select %p57, %s58, %s59
    %p63 = pneg %p57
    %p64 = scmp.eq.s32.totalorder %s22, 1
    %p65 = por %p63, %p64
    %p66 = scmp.ne.s32.totalorder %s58, %s61
    %p67 = scmp.eq.s32.totalorder %s22, 0
    %p68 = por %p66, %p67
    %p69 = scmp.ne.s32.totalorder %s58, %s61
    %p70 = scmp.eq.s32.totalorder %s27, 1
    %p71 = por %p69, %p70
    %p72 = scmp.ne.s32.totalorder %s61, %s62
    %p73 = scmp.eq.s32.totalorder %s27, 0
    %p74 = por %p72, %p73
    %p75 = scmp.ne.s32.totalorder %s61, %s62
    %p76 = scmp.eq.s32.totalorder %s28, 1
    %p77 = por %p75, %p76
    %p79 = scmp.ne.s32.totalorder %s62, %s78
    %p80 = scmp.eq.s32.totalorder %s28, 0
    %p81 = por %p79, %p80
    %s83 = sadd.s32 %s82, 1
    %p86 = scmp.eq.s32.totalorder %s22, 1
    %p87 = scmp.ne.s32.totalorder %s82, %s84
    %p88 = scmp.eq.s32.totalorder %s22, 0
    %p89 = por %p87, %p88
    %p90 = scmp.ne.s32.totalorder %s82, %s84
    %p91 = scmp.eq.s32.totalorder %s27, 1
    %p92 = por %p90, %p91
    %p93 = scmp.ne.s32.totalorder %s84, %s85
    %p94 = scmp.eq.s32.totalorder %s27, 0
    %p95 = por %p93, %p94
    %p96 = scmp.ne.s32.totalorder %s84, %s85
    %p97 = scmp.eq.s32.totalorder %s28, 1
    %p98 = por %p96, %p97
    %p100 = scmp.ne.s32.totalorder %s85, %s99
    %p101 = scmp.eq.s32.totalorder %s28, 0
    %p102 = por %p100, %p101
    %s104 = sadd.s32 %s103, 1
    %p107 = scmp.eq.s32.totalorder %s22, 1
    %p108 = scmp.ne.s32.totalorder %s103, %s105
    %p109 = scmp.eq.s32.totalorder %s22, 0
    %p110 = por %p108, %p109
    %p111 = scmp.ne.s32.totalorder %s103, %s105
    %p112 = scmp.eq.s32.totalorder %s27, 1
    %p113 = por %p111, %p112
    %p114 = scmp.ne.s32.totalorder %s105, %s106
    %p115 = scmp.eq.s32.totalorder %s27, 0
    %p116 = por %p114, %p115
    %p117 = scmp.ne.s32.totalorder %s105, %s106
    %p118 = scmp.eq.s32.totalorder %s28, 1
    %p119 = por %p117, %p118
    %p121 = scmp.ne.s32.totalorder %s106, %s120
    %p122 = scmp.eq.s32.totalorder %s28, 0
    %p123 = por %p121, %p122
    %s125 = sadd.s32 %s124, 1
    %p128 = scmp.eq.s32.totalorder %s22, 1
    %p129 = scmp.ne.s32.totalorder %s124, %s126
    %p130 = scmp.eq.s32.totalorder %s22, 0
    %p131 = por %p129, %p130
    %p132 = scmp.ne.s32.totalorder %s124, %s126
    %p133 = scmp.eq.s32.totalorder %s27, 1
    %p134 = por %p132, %p133
    %p135 = scmp.ne.s32.totalorder %s126, %s127
    %p136 = scmp.eq.s32.totalorder %s27, 0
    %p137 = por %p135, %p136
    %p138 = scmp.ne.s32.totalorder %s126, %s127
    %p139 = scmp.eq.s32.totalorder %s28, 1
    %p140 = por %p138, %p139
    %p142 = scmp.ne.s32.totalorder %s127, %s141
    %p143 = scmp.eq.s32.totalorder %s28, 0
    %p144 = por %p142, %p143
    %s146 = sadd.s32 %s145, 1
    %p149 = scmp.eq.s32.totalorder %s22, 1
    %p150 = scmp.ne.s32.totalorder %s145, %s147
    %p151 = scmp.eq.s32.totalorder %s22, 0
    %p152 = por %p150, %p151
    %p153 = scmp.ne.s32.totalorder %s145, %s147
    %p154 = scmp.eq.s32.totalorder %s27, 1
    %p155 = por %p153, %p154
    %p156 = scmp.ne.s32.totalorder %s147, %s148
    %p157 = scmp.eq.s32.totalorder %s27, 0
    %p158 = por %p156, %p157
    %p159 = scmp.ne.s32.totalorder %s147, %s148
    %p160 = scmp.eq.s32.totalorder %s28, 1
    %p161 = por %p159, %p160
    %p163 = scmp.ne.s32.totalorder %s148, %s162
    %p164 = scmp.eq.s32.totalorder %s28, 0
    %p165 = por %p163, %p164
    %s167 = sadd.s32 %s166, 1
    %p170 = scmp.eq.s32.totalorder %s22, 1
    %p171 = scmp.ne.s32.totalorder %s166, %s168
    %p172 = scmp.eq.s32.totalorder %s22, 0
    %p173 = por %p171, %p172
    %p174 = scmp.ne.s32.totalorder %s166, %s168
    %p175 = scmp.eq.s32.totalorder %s27, 1
    %p176 = por %p174, %p175
    %p177 = scmp.ne.s32.totalorder %s168, %s169
    %p178 = scmp.eq.s32.totalorder %s27, 0
    %p179 = por %p177, %p178
    %p180 = scmp.ne.s32.totalorder %s168, %s169
    %p181 = scmp.eq.s32.totalorder %s28, 1
    %p182 = por %p180, %p181
    %p184 = scmp.ne.s32.totalorder %s169, %s183
    %p185 = scmp.eq.s32.totalorder %s28, 0
    %p186 = por %p184, %p185
    %s188 = sadd.s32 %s187, 1
    %p191 = scmp.eq.s32.totalorder %s22, 1
    %p192 = scmp.ne.s32.totalorder %s187, %s189
    %p193 = scmp.eq.s32.totalorder %s22, 0
    %p194 = por %p192, %p193
    %p195 = scmp.ne.s32.totalorder %s187, %s189
    %p196 = scmp.eq.s32.totalorder %s27, 1
    %p197 = por %p195, %p196
    %p198 = scmp.ne.s32.totalorder %s189, %s190
    %p199 = scmp.eq.s32.totalorder %s27, 0
    %p200 = por %p198, %p199
    %p201 = scmp.ne.s32.totalorder %s189, %s190
    %p202 = scmp.eq.s32.totalorder %s28, 1
    %p203 = por %p201, %p202
    %p205 = scmp.ne.s32.totalorder %s190, %s204
    %p206 = scmp.eq.s32.totalorder %s28, 0
    %p207 = por %p205, %p206
    %s209 = sadd.s32 %s208, 1
    %p212 = scmp.eq.s32.totalorder %s22, 1
    %p213 = scmp.ne.s32.totalorder %s208, %s210
    %p214 = scmp.eq.s32.totalorder %s22, 0
    %p215 = por %p213, %p214
    %p216 = scmp.ne.s32.totalorder %s208, %s210
    %p217 = scmp.eq.s32.totalorder %s27, 1
    %p218 = por %p216, %p217
    %p219 = scmp.ne.s32.totalorder %s210, %s211
    %p220 = scmp.eq.s32.totalorder %s27, 0
    %p221 = por %p219, %p220
    %p222 = scmp.ne.s32.totalorder %s210, %s211
    %p223 = scmp.eq.s32.totalorder %s28, 1
    %p224 = por %p222, %p223
    %p226 = scmp.ne.s32.totalorder %s211, %s225
    %p227 = scmp.eq.s32.totalorder %s28, 0
    %p228 = por %p226, %p227
    %s230 = sadd.s32 %s229, 1
    %p233 = scmp.eq.s32.totalorder %s22, 1
    %p234 = scmp.ne.s32.totalorder %s229, %s231
    %p235 = scmp.eq.s32.totalorder %s22, 0
    %p236 = por %p234, %p235
    %p237 = scmp.ne.s32.totalorder %s229, %s231
    %p238 = scmp.eq.s32.totalorder %s27, 1
    %p239 = por %p237, %p238
    %p240 = scmp.ne.s32.totalorder %s231, %s232
    %p241 = scmp.eq.s32.totalorder %s27, 0
    %p242 = por %p240, %p241
    %p243 = scmp.ne.s32.totalorder %s231, %s232
    %p244 = scmp.eq.s32.totalorder %s28, 1
    %p245 = por %p243, %p244
    %p247 = scmp.ne.s32.totalorder %s232, %s246
    %p248 = scmp.eq.s32.totalorder %s28, 0
    %p249 = por %p247, %p248
    %s251 = sadd.s32 %s250, 1
    %p254 = scmp.eq.s32.totalorder %s22, 1
    %p255 = scmp.ne.s32.totalorder %s250, %s252
    %p256 = scmp.eq.s32.totalorder %s22, 0
    %p257 = por %p255, %p256
    %p258 = scmp.ne.s32.totalorder %s250, %s252
    %p259 = scmp.eq.s32.totalorder %s27, 1
    %p260 = por %p258, %p259
    %p261 = scmp.ne.s32.totalorder %s252, %s253
    %p262 = scmp.eq.s32.totalorder %s27, 0
    %p263 = por %p261, %p262
    %p264 = scmp.ne.s32.totalorder %s252, %s253
    %p265 = scmp.eq.s32.totalorder %s28, 1
    %p266 = por %p264, %p265
    %p268 = scmp.ne.s32.totalorder %s253, %s267
    %p269 = scmp.eq.s32.totalorder %s28, 0
    %p270 = por %p268, %p269
    %s272 = sadd.s32 %s271, 1
    %p275 = scmp.eq.s32.totalorder %s22, 1
    %p276 = scmp.ne.s32.totalorder %s271, %s273
    %p277 = scmp.eq.s32.totalorder %s22, 0
    %p278 = por %p276, %p277
    %p279 = scmp.ne.s32.totalorder %s271, %s273
    %p280 = scmp.eq.s32.totalorder %s27, 1
    %p281 = por %p279, %p280
    %p282 = scmp.ne.s32.totalorder %s273, %s274
    %p283 = scmp.eq.s32.totalorder %s27, 0
    %p284 = por %p282, %p283
    %p285 = scmp.ne.s32.totalorder %s273, %s274
    %p286 = scmp.eq.s32.totalorder %s28, 1
    %p287 = por %p285, %p286
    %p289 = scmp.ne.s32.totalorder %s274, %s288
    %p290 = scmp.eq.s32.totalorder %s28, 0
    %p291 = por %p289, %p290
    %s293 = sadd.s32 %s292, 1
    %p296 = scmp.eq.s32.totalorder %s22, 1
    %p297 = scmp.ne.s32.totalorder %s292, %s294
    %p298 = scmp.eq.s32.totalorder %s22, 0
    %p299 = por %p297, %p298
    %p300 = scmp.ne.s32.totalorder %s292, %s294
    %p301 = scmp.eq.s32.totalorder %s27, 1
    %p302 = por %p300, %p301
    %p303 = scmp.ne.s32.totalorder %s294, %s295
    %p304 = scmp.eq.s32.totalorder %s27, 0
    %p305 = por %p303, %p304
    %p306 = scmp.ne.s32.totalorder %s294, %s295
    %p307 = scmp.eq.s32.totalorder %s28, 1
    %p308 = por %p306, %p307
    %p310 = scmp.ne.s32.totalorder %s295, %s309
    %p311 = scmp.eq.s32.totalorder %s28, 0
    %p312 = por %p310, %p311
    %s314 = sadd.s32 %s313, 1
    %p317 = scmp.eq.s32.totalorder %s22, 1
    %p318 = scmp.ne.s32.totalorder %s313, %s315
    %p319 = scmp.eq.s32.totalorder %s22, 0
    %p320 = por %p318, %p319
    %p321 = scmp.ne.s32.totalorder %s313, %s315
    %p322 = scmp.eq.s32.totalorder %s27, 1
    %p323 = por %p321, %p322
    %p324 = scmp.ne.s32.totalorder %s315, %s316
    %p325 = scmp.eq.s32.totalorder %s27, 0
    %p326 = por %p324, %p325
    %p327 = scmp.ne.s32.totalorder %s315, %s316
    %p328 = scmp.eq.s32.totalorder %s28, 1
    %p329 = por %p327, %p328
    %p331 = scmp.ne.s32.totalorder %s316, %s330
    %p332 = scmp.eq.s32.totalorder %s28, 0
    %p333 = por %p331, %p332
    %s334 = ssub.s32 %s22, %s29
    %p335 = scmp.eq.s32.totalorder %s334, 0
    %s337 = sadd.s32 %s336, 1
    %s338 = scalar_select %p335, %s336, %s337
    %p341 = pneg %p335
    %p342 = scmp.eq.s32.totalorder %s22, 1
    %p343 = por %p341, %p342
    %p344 = scmp.ne.s32.totalorder %s336, %s339
    %p345 = scmp.eq.s32.totalorder %s22, 0
    %p346 = por %p344, %p345
    %p347 = scmp.ne.s32.totalorder %s336, %s339
    %p348 = scmp.eq.s32.totalorder %s27, 1
    %p349 = por %p347, %p348
    %p350 = scmp.ne.s32.totalorder %s339, %s340
    %p351 = scmp.eq.s32.totalorder %s27, 0
    %p352 = por %p350, %p351
    %p353 = scmp.ne.s32.totalorder %s339, %s340
    %p354 = scmp.eq.s32.totalorder %s28, 1
    %p355 = por %p353, %p354
    %p357 = scmp.ne.s32.totalorder %s340, %s356
    %p358 = scmp.eq.s32.totalorder %s28, 0
    %p359 = por %p357, %p358
    %s360 = ssub.s32 %s22, %s29
    %p361 = scmp.eq.s32.totalorder %s360, 0
    %s363 = sadd.s32 %s362, 1
    %s364 = scalar_select %p361, %s362, %s363
    %p367 = pneg %p361
    %p368 = scmp.eq.s32.totalorder %s22, 1
    %p369 = por %p367, %p368
    %p370 = scmp.ne.s32.totalorder %s362, %s365
    %p371 = scmp.eq.s32.totalorder %s22, 0
    %p372 = por %p370, %p371
    %p373 = scmp.ne.s32.totalorder %s362, %s365
    %p374 = scmp.eq.s32.totalorder %s27, 1
    %p375 = por %p373, %p374
    %p376 = scmp.ne.s32.totalorder %s365, %s366
    %p377 = scmp.eq.s32.totalorder %s27, 0
    %p378 = por %p376, %p377
    %p379 = scmp.ne.s32.totalorder %s365, %s366
    %p380 = scmp.eq.s32.totalorder %s28, 1
    %p381 = por %p379, %p380
    %p383 = scmp.ne.s32.totalorder %s366, %s382
    %p384 = scmp.eq.s32.totalorder %s28, 0
    %p385 = por %p383, %p384
    %p386 = scmp.le.s32.totalorder 1, %s22
    %p387 = scmp.lt.s32.totalorder %s22, 3
    %p388 = pnand %p386, %p387
    %p389 = pneg %p388
    // Predicated region
    $region9: #{vae_forward.1} parent=5 // pred_check
      _
    $region10: #{vae_forward.1} parent=5 // pred_check_branch
      %391 = sbr.rel (%p388) target = $region12
    $region11: #{vae_forward.1} parent=5 // pred_region
      %s392 = ssub.s32 %s22, 1
      // Predicated region
      $region13: #{vae_forward.1} parent=11 // pred_check
        %p393 = pneg %p95
      $region14: #{vae_forward.1} parent=11 // pred_check_branch
        %395 = sbr.rel (%p393) target = $region16
      $region15: #{vae_forward.1} parent=11 // pred_region
        _
      $region16: #{vae_forward.1} parent=11 // pred_fallthru
        _
      // Predicated region
      $region17: #{vae_forward.1} parent=11 // pred_check
        %p396 = pneg %p116
      $region18: #{vae_forward.1} parent=11 // pred_check_branch
        %398 = sbr.rel (%p396) target = $region20
      $region19: #{vae_forward.1} parent=11 // pred_region
        _
      $region20: #{vae_forward.1} parent=11 // pred_fallthru
        _
      // Predicated region
      $region21: #{vae_forward.1} parent=11 // pred_check
        %p399 = pneg %p137
      $region22: #{vae_forward.1} parent=11 // pred_check_branch
        %401 = sbr.rel (%p399) target = $region24
      $region23: #{vae_forward.1} parent=11 // pred_region
        _
      $region24: #{vae_forward.1} parent=11 // pred_fallthru
        _
      // Predicated region
      $region25: #{vae_forward.1} parent=11 // pred_check
        %p402 = pneg %p158
      $region26: #{vae_forward.1} parent=11 // pred_check_branch
        %404 = sbr.rel (%p402) target = $region28
      $region27: #{vae_forward.1} parent=11 // pred_region
        _
      $region28: #{vae_forward.1} parent=11 // pred_fallthru
        _
      // Predicated region
      $region29: #{vae_forward.1} parent=11 // pred_check
        %p405 = pneg %p179
      $region30: #{vae_forward.1} parent=11 // pred_check_branch
        %407 = sbr.rel (%p405) target = $region32
      $region31: #{vae_forward.1} parent=11 // pred_region
        _
      $region32: #{vae_forward.1} parent=11 // pred_fallthru
        _
      // Predicated region
      $region33: #{vae_forward.1} parent=11 // pred_check
        %p408 = pneg %p200
      $region34: #{vae_forward.1} parent=11 // pred_check_branch
        %410 = sbr.rel (%p408) target = $region36
      $region35: #{vae_forward.1} parent=11 // pred_region
        _
      $region36: #{vae_forward.1} parent=11 // pred_fallthru
        _
      // Predicated region
      $region37: #{vae_forward.1} parent=11 // pred_check
        %p411 = pneg %p221
      $region38: #{vae_forward.1} parent=11 // pred_check_branch
        %413 = sbr.rel (%p411) target = $region40
      $region39: #{vae_forward.1} parent=11 // pred_region
        _
      $region40: #{vae_forward.1} parent=11 // pred_fallthru
        _
      // Predicated region
      $region41: #{vae_forward.1} parent=11 // pred_check
        %p414 = pneg %p242
      $region42: #{vae_forward.1} parent=11 // pred_check_branch
        %416 = sbr.rel (%p414) target = $region44
      $region43: #{vae_forward.1} parent=11 // pred_region
        _
      $region44: #{vae_forward.1} parent=11 // pred_fallthru
        _
      // Predicated region
      $region45: #{vae_forward.1} parent=11 // pred_check
        %p417 = pneg %p263
      $region46: #{vae_forward.1} parent=11 // pred_check_branch
        %419 = sbr.rel (%p417) target = $region48
      $region47: #{vae_forward.1} parent=11 // pred_region
        _
      $region48: #{vae_forward.1} parent=11 // pred_fallthru
        _
      // Predicated region
      $region49: #{vae_forward.1} parent=11 // pred_check
        %p420 = pneg %p284
      $region50: #{vae_forward.1} parent=11 // pred_check_branch
        %422 = sbr.rel (%p420) target = $region52
      $region51: #{vae_forward.1} parent=11 // pred_region
        _
      $region52: #{vae_forward.1} parent=11 // pred_fallthru
        _
      // Predicated region
      $region53: #{vae_forward.1} parent=11 // pred_check
        %p423 = pneg %p305
      $region54: #{vae_forward.1} parent=11 // pred_check_branch
        %425 = sbr.rel (%p423) target = $region56
      $region55: #{vae_forward.1} parent=11 // pred_region
        _
      $region56: #{vae_forward.1} parent=11 // pred_fallthru
        _
      // Predicated region
      $region57: #{vae_forward.1} parent=11 // pred_check
        %p426 = pneg %p326
      $region58: #{vae_forward.1} parent=11 // pred_check_branch
        %428 = sbr.rel (%p426) target = $region60
      $region59: #{vae_forward.1} parent=11 // pred_region
        _
      $region60: #{vae_forward.1} parent=11 // pred_fallthru
        _
    $region12: #{vae_forward.1} parent=5 // pred_fallthru
      _
    %p429 = scmp.lt.s32.totalorder %s22, 2
    // Predicated region
    $region61: #{vae_forward.1} parent=5 // pred_check
      %p430 = pneg %p429
    $region62: #{vae_forward.1} parent=5 // pred_check_branch
      %432 = sbr.rel (%p430) target = $region64
    $region63: #{vae_forward.1} parent=5 // pred_region
      // Predicated region
      $region65: #{vae_forward.1} parent=63 // pred_check
        %p433 = pneg %p42
      $region66: #{vae_forward.1} parent=63 // pred_check_branch
        %435 = sbr.rel (%p433) target = $region68
      $region67: #{vae_forward.1} parent=63 // pred_region
        %s436 = smul.u32 16, %s22
        %p437 = scmp.lt.s32.totalorder %s436, 31
        %s438 = scalar_select %p437, %s436, 31
        %s439 = smul.addr %s438, 4
        %s440 = scalar_lea.vmem %s0, %s439
        %s441 = smul.u32 16, %s22
      $region68: #{vae_forward.1} parent=63 // pred_fallthru
        _
      // Predicated region
      $region69: #{vae_forward.1} parent=63 // pred_check
        %p442 = pneg %p68
      $region70: #{vae_forward.1} parent=63 // pred_check_branch
        %444 = sbr.rel (%p442) target = $region72
      $region71: #{vae_forward.1} parent=63 // pred_region
        %s445 = smul.u32 16, %s22
        %p446 = scmp.lt.s32.totalorder %s445, 31
        %s447 = scalar_select %p446, %s445, 31
        %s448 = smul.addr %s447, 8
        %s449 = scalar_lea.vmem %s1, %s448
        %s450 = smul.u32 16, %s22
      $region72: #{vae_forward.1} parent=63 // pred_fallthru
        _
    $region64: #{vae_forward.1} parent=5 // pred_fallthru
      _
    %p451 = scmp.le.s32.totalorder 1, %s22
    %p452 = scmp.lt.s32.totalorder %s22, 3
    %p453 = pnand %p451, %p452
    %p454 = pneg %p453
    // Predicated region
    $region73: #{vae_forward.1} parent=5 // pred_check
      _
    $region74: #{vae_forward.1} parent=5 // pred_check_branch
      %456 = sbr.rel (%p453) target = $region76
    $region75: #{vae_forward.1} parent=5 // pred_region
      %s457 = ssub.s32 %s22, 1
      %s458 = smul.u32 16, %s27
      %p459 = scmp.lt.s32.totalorder %s458, 31
      %s460 = scalar_select %p459, %s458, 31
      %s461 = smul.addr %s460, 4
      %s462 = scalar_lea.vmem %s0, %s461
      %p463 = pneg %p48
      %p464 = pneg %p45
      %s465 = smul.u32 16, %s27
      %p466 = scmp.lt.s32.totalorder %s465, 31
      %s467 = scalar_select %p466, %s465, 31
      %s468 = smul.addr %s467, 8
      %s469 = scalar_lea.vmem %s1, %s468
      %p470 = pneg %p74
      %p471 = pneg %p71
      %p472 = pneg %p95
      %p473 = pneg %p92
      %p474 = pneg %p116
      %p475 = pneg %p113
      %p476 = pneg %p137
      %p477 = pneg %p134
      %p478 = pneg %p158
      %p479 = pneg %p155
      %p480 = pneg %p179
      %p481 = pneg %p176
      %p482 = pneg %p200
      %p483 = pneg %p197
      %p484 = pneg %p221
      %p485 = pneg %p218
      %p486 = pneg %p242
      %p487 = pneg %p239
      %p488 = pneg %p263
      %p489 = pneg %p260
      %p490 = pneg %p284
      %p491 = pneg %p281
      %p492 = pneg %p305
      %p493 = pneg %p302
      %p494 = pneg %p326
      %p495 = pneg %p323
      %p496 = pneg %p352
      %p497 = pneg %p349
      %s498 = smul.u32 16, %s27
      %p499 = scmp.lt.s32.totalorder %s498, 31
      %s500 = scalar_select %p499, %s498, 31
      %s501 = smul.addr %s500, 8
      %s502 = scalar_lea.vmem %s14, %s501
      %p503 = pneg %p378
      %p504 = pneg %p375
      %s505 = smul.u32 16, %s27
      %p506 = scmp.lt.s32.totalorder %s505, 31
      %s507 = scalar_select %p506, %s505, 31
      %s508 = smul.addr %s507, 8
      %s509 = scalar_lea.vmem %s15, %s508
      %s510 = smul.u32 16, %s27
      %p511 = scmp.lt.s32.totalorder %s510, 31
      %s512 = scalar_select %p511, %s510, 31
      %s513 = smul.addr %s512, 4
      %s514 = scalar_lea.vmem %s0, %s513
      %s515 = smul.u32 16, %s27
      %s516 = smul.u32 16, %s27
      %p517 = scmp.lt.s32.totalorder %s516, 31
      %s518 = scalar_select %p517, %s516, 31
      %s519 = smul.addr %s518, 8
      %s520 = scalar_lea.vmem %s1, %s519
      %s521 = smul.u32 16, %s27
      %s522 = smul.u32 16, %s27
      %p523 = scmp.lt.s32.totalorder %s522, 31
      %s524 = scalar_select %p523, %s522, 31
      %s525 = smul.addr %s524, 8
      %s526 = scalar_lea.vmem %s14, %s525
      %s527 = smul.u32 16, %s27
      %s528 = smul.u32 16, %s27
      %p529 = scmp.lt.s32.totalorder %s528, 31
      %s530 = scalar_select %p529, %s528, 31
      %s531 = smul.addr %s530, 8
      %s532 = scalar_lea.vmem %s15, %s531
      %s533 = smul.u32 16, %s27
      %v535 = vld [vmem:[%s514] sm:$0xf]
      %v536 = vld [vmem:[%s514 + $0x4] sm:$0xf]
      %v537 = vld [vmem:[%s514 + $0x8] sm:$0xf]
      %v538 = vld [vmem:[%s514 + $0xc] sm:$0xf]
      %v539 = vld [vmem:[%s514 + $0x10] sm:$0xf]
      %v540 = vld [vmem:[%s514 + $0x14] sm:$0xf]
      %v541 = vld [vmem:[%s514 + $0x18] sm:$0xf]
      %v542 = vld [vmem:[%s514 + $0x1c] sm:$0xf]
      %v543 = vld [vmem:[%s514 + $0x20] sm:$0xf]
      %v544 = vld [vmem:[%s514 + $0x24] sm:$0xf]
      %v545 = vld [vmem:[%s514 + $0x28] sm:$0xf]
      %v546 = vld [vmem:[%s514 + $0x2c] sm:$0xf]
      %v547 = vld [vmem:[%s514 + $0x30] sm:$0xf]
      %v548 = vld [vmem:[%s514 + $0x34] sm:$0xf]
      %v549 = vld [vmem:[%s514 + $0x38] sm:$0xf]
      %v550 = vld [vmem:[%s514 + $0x3c] sm:$0xf]
      %v551 = vld [vmem:[%s2] sm:$0xff]
      %v552 = vld [vmem:[%s2 + $0x8] sm:$0xff]
      %v553 = vld [vmem:[%s2 + $0x10] sm:$0xff]
      %v554 = vld [vmem:[%s2 + $0x18] sm:$0xff]
      %v555 = vld [vmem:[%s3] sm:$0x3]
      %v557 = vlaneseq
      %v558 = vshrl.u32 %v557, 7
      %v559 = vsub.s32 0, %v558
      %v560 = vrot.slane %v555, %v559
      %v561 = vlaneseq
      %v562 = vshrl.u32 %v561, 7
      %v563 = vsub.s32 1, %v562
      %v564 = vrot.slane %v555, %v563
      %v583 = vunpack.c.l.b16 %v535
      %v584 = vunpack.c.l.b16 %v536
      %v585 = vunpack.c.l.b16 %v537
      %v586 = vunpack.c.l.b16 %v538
      %v587 = vunpack.c.l.b16 %v539
      %v588 = vunpack.c.l.b16 %v540
      %v589 = vunpack.c.l.b16 %v541
      %v590 = vunpack.c.l.b16 %v542
      %v591 = vunpack.c.l.b16 %v543
      %v592 = vunpack.c.l.b16 %v544
      %v593 = vunpack.c.l.b16 %v545
      %v594 = vunpack.c.l.b16 %v546
      %v595 = vunpack.c.l.b16 %v547
      %v596 = vunpack.c.l.b16 %v548
      %v597 = vunpack.c.l.b16 %v549
      %v598 = vunpack.c.l.b16 %v550
      %v599 = vpack.c.b16 %v584, %v583
      %v600 = vpack.c.b16 %v586, %v585
      %v601 = vpack.c.b16 %v588, %v587
      %v602 = vpack.c.b16 %v590, %v589
      %v603 = vpack.c.b16 %v592, %v591
      %v604 = vpack.c.b16 %v594, %v593
      %v605 = vpack.c.b16 %v596, %v595
      %v606 = vpack.c.b16 %v598, %v597
      %v611 = vunpack.c.l.b16 %v551
      %v612 = vunpack.c.h.b16 %v551
      %v613 = vunpack.c.l.b16 %v552
      %v614 = vunpack.c.h.b16 %v552
      %v615 = vunpack.c.l.b16 %v553
      %v616 = vunpack.c.h.b16 %v553
      %v617 = vunpack.c.l.b16 %v554
      %v618 = vunpack.c.h.b16 %v554
      %v619 = vpack.c.b16 %v613, %v611
      %v620 = vpack.c.b16 %v614, %v612
      %v621 = vpack.c.b16 %v617, %v615
      %v622 = vpack.c.b16 %v618, %v616
      %vm627 = vcmask 261120
      %v629 = vsel %vm627, %v599, 0
      %v632 = vsel %vm627, %v600, 0
      %v635 = vsel %vm627, %v601, 0
      %v638 = vsel %vm627, %v602, 0
      %v641 = vsel %vm627, %v603, 0
      %v644 = vsel %vm627, %v604, 0
      %v647 = vsel %vm627, %v605, 0
      %v650 = vsel %vm627, %v606, 0
      %652 = vmatprep.subr.bf16.mxu0 0
      %653 = vmatpush1.bf16.msra.mxu0 0
      %654 = vmatprep.subr.bf16.mxu0 0
      %655 = vmatpush1.bf16.msra.mxu0 0
      %656 = vmatprep.subr.bf16.mxu0 0
      %657 = vmatpush1.bf16.msra.mxu0 0
      %658 = vmatprep.subr.bf16.mxu0 0
      %659 = vmatpush1.bf16.msra.mxu0 0
      %660 = vmatprep.subr.bf16.mxu0 0
      %661 = vmatpush1.bf16.msra.mxu0 0
      %662 = vmatprep.subr.bf16.mxu0 0
      %663 = vmatpush1.bf16.msra.mxu0 0
      %664 = vmatprep.subr.bf16.mxu0 %v622
      %665 = vmatpush1.bf16.msra.mxu0 %v621
      %666 = vmatprep.subr.bf16.mxu0 %v620
      %667 = vmatpush1.bf16.msra.mxu0 %v619
      %668 = vmatprep.subr.bf16.mxu0 0
      %669 = vmatpush2.bf16.msra.mxu0 0
      %670 = vmatprep.subr.bf16.mxu0 0
      %671 = vmatpush2.bf16.msra.mxu0 0
      %672 = vmatprep.subr.bf16.mxu0 0
      %673 = vmatpush2.bf16.msra.mxu0 0
      %674 = vmatprep.subr.bf16.mxu0 0
      %675 = vmatpush2.bf16.msra.mxu0 0
      %676 = vmatprep.subr.bf16.mxu0 0
      %677 = vmatpush2.bf16.msra.mxu0 0
      %678 = vmatprep.subr.bf16.mxu0 0
      %679 = vmatpush2.bf16.msra.mxu0 0
      %680 = vmatprep.subr.bf16.mxu0 0
      %681 = vmatpush2.bf16.msra.mxu0 0
      %682 = vmatprep.subr.bf16.mxu0 0
      %683 = vmatpush2.bf16.msra.mxu0 0
      %684 = vmatprep.mubr.bf16.mxu0 0
      %685 = vmatmul.mubr.bf16.gmra.mxu0 %v629
      %v686 = vpop.f32.mrf.mxu0
      %v687 = vadd.f32 %v560, %v686
      %v688 = vpop.f32.mrf.mxu0
      %v689 = vadd.f32 %v564, %v688
      %v690 = vpop.f32.mrf.mxu0
      %v691 = vadd.f32 %v560, %v690
      %v692 = vpop.f32.mrf.mxu0
      %v693 = vadd.f32 %v564, %v692
      %694 = vmatprep.mubr.bf16.mxu0 0
      %695 = vmatmul.mubr.bf16.gmra.mxu0 %v632
      %v696 = vpop.f32.mrf.mxu0
      %v697 = vadd.f32 %v560, %v696
      %v698 = vpop.f32.mrf.mxu0
      %v699 = vadd.f32 %v564, %v698
      %v700 = vpop.f32.mrf.mxu0
      %v701 = vadd.f32 %v560, %v700
      %v702 = vpop.f32.mrf.mxu0
      %v703 = vadd.f32 %v564, %v702
      %704 = vmatprep.mubr.bf16.mxu0 0
      %705 = vmatmul.mubr.bf16.gmra.mxu0 %v635
      %v706 = vpop.f32.mrf.mxu0
      %v707 = vadd.f32 %v560, %v706
      %v708 = vpop.f32.mrf.mxu0
      %v709 = vadd.f32 %v564, %v708
      %v710 = vpop.f32.mrf.mxu0
      %v711 = vadd.f32 %v560, %v710
      %v712 = vpop.f32.mrf.mxu0
      %v713 = vadd.f32 %v564, %v712
      %714 = vmatprep.mubr.bf16.mxu0 0
      %715 = vmatmul.mubr.bf16.gmra.mxu0 %v638
      %v716 = vpop.f32.mrf.mxu0
      %v717 = vadd.f32 %v560, %v716
      %v718 = vpop.f32.mrf.mxu0
      %v719 = vadd.f32 %v564, %v718
      %v720 = vpop.f32.mrf.mxu0
      %v721 = vadd.f32 %v560, %v720
      %v722 = vpop.f32.mrf.mxu0
      %v723 = vadd.f32 %v564, %v722
      %724 = vmatprep.mubr.bf16.mxu0 0
      %725 = vmatmul.mubr.bf16.gmra.mxu0 %v641
      %v726 = vpop.f32.mrf.mxu0
      %v727 = vadd.f32 %v560, %v726
      %v728 = vpop.f32.mrf.mxu0
      %v729 = vadd.f32 %v564, %v728
      %v730 = vpop.f32.mrf.mxu0
      %v731 = vadd.f32 %v560, %v730
      %v732 = vpop.f32.mrf.mxu0
      %v733 = vadd.f32 %v564, %v732
      %734 = vmatprep.mubr.bf16.mxu0 0
      %735 = vmatmul.mubr.bf16.gmra.mxu0 %v644
      %v736 = vpop.f32.mrf.mxu0
      %v737 = vadd.f32 %v560, %v736
      %v738 = vpop.f32.mrf.mxu0
      %v739 = vadd.f32 %v564, %v738
      %v740 = vpop.f32.mrf.mxu0
      %v741 = vadd.f32 %v560, %v740
      %v742 = vpop.f32.mrf.mxu0
      %v743 = vadd.f32 %v564, %v742
      %744 = vmatprep.mubr.bf16.mxu0 0
      %745 = vmatmul.mubr.bf16.gmra.mxu0 %v647
      %v746 = vpop.f32.mrf.mxu0
      %v747 = vadd.f32 %v560, %v746
      %v748 = vpop.f32.mrf.mxu0
      %v749 = vadd.f32 %v564, %v748
      %v750 = vpop.f32.mrf.mxu0
      %v751 = vadd.f32 %v560, %v750
      %v752 = vpop.f32.mrf.mxu0
      %v753 = vadd.f32 %v564, %v752
      %754 = vmatprep.mubr.bf16.mxu0 0
      %755 = vmatmul.mubr.bf16.gmra.mxu0 %v650
      %v756 = vpop.f32.mrf.mxu0
      %v757 = vadd.f32 %v560, %v756
      %v758 = vpop.f32.mrf.mxu0
      %v759 = vadd.f32 %v564, %v758
      %v760 = vpop.f32.mrf.mxu0
      %v761 = vadd.f32 %v560, %v760
      %v762 = vpop.f32.mrf.mxu0
      %v763 = vadd.f32 %v564, %v762
      %764 = vdwg.mxu0
      %v765 = vmax.f32 %v687, 0.0
      %v766 = vmax.f32 %v689, 0.0
      %v767 = vmax.f32 %v691, 0.0
      %v768 = vmax.f32 %v693, 0.0
      %v769 = vmax.f32 %v697, 0.0
      %v770 = vmax.f32 %v699, 0.0
      %v771 = vmax.f32 %v701, 0.0
      %v772 = vmax.f32 %v703, 0.0
      %v773 = vmax.f32 %v707, 0.0
      %v774 = vmax.f32 %v709, 0.0
      %v775 = vmax.f32 %v711, 0.0
      %v776 = vmax.f32 %v713, 0.0
      %v777 = vmax.f32 %v717, 0.0
      %v778 = vmax.f32 %v719, 0.0
      %v779 = vmax.f32 %v721, 0.0
      %v780 = vmax.f32 %v723, 0.0
      %v781 = vmax.f32 %v727, 0.0
      %v782 = vmax.f32 %v729, 0.0
      %v783 = vmax.f32 %v731, 0.0
      %v784 = vmax.f32 %v733, 0.0
      %v785 = vmax.f32 %v737, 0.0
      %v786 = vmax.f32 %v739, 0.0
      %v787 = vmax.f32 %v741, 0.0
      %v788 = vmax.f32 %v743, 0.0
      %v789 = vmax.f32 %v747, 0.0
      %v790 = vmax.f32 %v749, 0.0
      %v791 = vmax.f32 %v751, 0.0
      %v792 = vmax.f32 %v753, 0.0
      %v793 = vmax.f32 %v757, 0.0
      %v794 = vmax.f32 %v759, 0.0
      %v795 = vmax.f32 %v761, 0.0
      %v796 = vmax.f32 %v763, 0.0
      %v797 = vpack.c.bf16 %v767, %v765
      %v798 = vpack.c.bf16 %v768, %v766
      %v799 = vpack.c.bf16 %v771, %v769
      %v800 = vpack.c.bf16 %v772, %v770
      %v801 = vpack.c.bf16 %v775, %v773
      %v802 = vpack.c.bf16 %v776, %v774
      %v803 = vpack.c.bf16 %v779, %v777
      %v804 = vpack.c.bf16 %v780, %v778
      %v805 = vpack.c.bf16 %v783, %v781
      %v806 = vpack.c.bf16 %v784, %v782
      %v807 = vpack.c.bf16 %v787, %v785
      %v808 = vpack.c.bf16 %v788, %v786
      %v809 = vpack.c.bf16 %v791, %v789
      %v810 = vpack.c.bf16 %v792, %v790
      %v811 = vpack.c.bf16 %v795, %v793
      %v812 = vpack.c.bf16 %v796, %v794
      %v813 = vld [vmem:[%s4] sm:$0xf]
      %v814 = vld [vmem:[%s4 + $0x4] sm:$0xf]
      %v815 = vld [vmem:[%s4 + $0x8] sm:$0xf]
      %v816 = vld [vmem:[%s4 + $0xc] sm:$0xf]
      %v817 = vld [vmem:[%s4 + $0x10] sm:$0xf]
      %v818 = vld [vmem:[%s4 + $0x14] sm:$0xf]
      %v819 = vld [vmem:[%s4 + $0x18] sm:$0xf]
      %v820 = vld [vmem:[%s4 + $0x1c] sm:$0xf]
      %v821 = vld [vmem:[%s4 + $0x20] sm:$0xf]
      %v822 = vld [vmem:[%s4 + $0x24] sm:$0xf]
      %v823 = vld [vmem:[%s4 + $0x28] sm:$0xf]
      %v824 = vld [vmem:[%s4 + $0x2c] sm:$0xf]
      %v825 = vld [vmem:[%s4 + $0x30] sm:$0xf]
      %v826 = vld [vmem:[%s4 + $0x34] sm:$0xf]
      %v827 = vld [vmem:[%s4 + $0x38] sm:$0xf]
      %v828 = vld [vmem:[%s4 + $0x3c] sm:$0xf]
      %v829 = vld [vmem:[%s4 + $0x40] sm:$0xf]
      %v830 = vld [vmem:[%s4 + $0x44] sm:$0xf]
      %v831 = vld [vmem:[%s4 + $0x48] sm:$0xf]
      %v832 = vld [vmem:[%s4 + $0x4c] sm:$0xf]
      %v833 = vld [vmem:[%s4 + $0x50] sm:$0xf]
      %v834 = vld [vmem:[%s4 + $0x54] sm:$0xf]
      %v835 = vld [vmem:[%s4 + $0x58] sm:$0xf]
      %v836 = vld [vmem:[%s4 + $0x5c] sm:$0xf]
      %v837 = vld [vmem:[%s4 + $0x60] sm:$0xf]
      %v838 = vld [vmem:[%s4 + $0x64] sm:$0xf]
      %v839 = vld [vmem:[%s4 + $0x68] sm:$0xf]
      %v840 = vld [vmem:[%s4 + $0x6c] sm:$0xf]
      %v841 = vld [vmem:[%s4 + $0x70] sm:$0xf]
      %v842 = vld [vmem:[%s4 + $0x74] sm:$0xf]
      %v843 = vld [vmem:[%s4 + $0x78] sm:$0xf]
      %v844 = vld [vmem:[%s4 + $0x7c] sm:$0xf]
      %v845 = vld [vmem:[%s5] sm:$0x1]
      %v847 = vlaneseq
      %v848 = vshrl.u32 %v847, 7
      %v849 = vsub.s32 0, %v848
      %v850 = vrot.slane %v845, %v849
      %v884 = vunpack.c.l.b16 %v813
      %v885 = vunpack.c.l.b16 %v814
      %v886 = vunpack.c.l.b16 %v815
      %v887 = vunpack.c.l.b16 %v816
      %v888 = vunpack.c.l.b16 %v817
      %v889 = vunpack.c.l.b16 %v818
      %v890 = vunpack.c.l.b16 %v819
      %v891 = vunpack.c.l.b16 %v820
      %v892 = vunpack.c.l.b16 %v821
      %v893 = vunpack.c.l.b16 %v822
      %v894 = vunpack.c.l.b16 %v823
      %v895 = vunpack.c.l.b16 %v824
      %v896 = vunpack.c.l.b16 %v825
      %v897 = vunpack.c.l.b16 %v826
      %v898 = vunpack.c.l.b16 %v827
      %v899 = vunpack.c.l.b16 %v828
      %v900 = vunpack.c.l.b16 %v829
      %v901 = vunpack.c.l.b16 %v830
      %v902 = vunpack.c.l.b16 %v831
      %v903 = vunpack.c.l.b16 %v832
      %v904 = vunpack.c.l.b16 %v833
      %v905 = vunpack.c.l.b16 %v834
      %v906 = vunpack.c.l.b16 %v835
      %v907 = vunpack.c.l.b16 %v836
      %v908 = vunpack.c.l.b16 %v837
      %v909 = vunpack.c.l.b16 %v838
      %v910 = vunpack.c.l.b16 %v839
      %v911 = vunpack.c.l.b16 %v840
      %v912 = vunpack.c.l.b16 %v841
      %v913 = vunpack.c.l.b16 %v842
      %v914 = vunpack.c.l.b16 %v843
      %v915 = vunpack.c.l.b16 %v844
      %v916 = vpack.c.b16 %v885, %v884
      %v917 = vpack.c.b16 %v887, %v886
      %v918 = vpack.c.b16 %v889, %v888
      %v919 = vpack.c.b16 %v891, %v890
      %v920 = vpack.c.b16 %v893, %v892
      %v921 = vpack.c.b16 %v895, %v894
      %v922 = vpack.c.b16 %v897, %v896
      %v923 = vpack.c.b16 %v899, %v898
      %v924 = vpack.c.b16 %v901, %v900
      %v925 = vpack.c.b16 %v903, %v902
      %v926 = vpack.c.b16 %v905, %v904
      %v927 = vpack.c.b16 %v907, %v906
      %v928 = vpack.c.b16 %v909, %v908
      %v929 = vpack.c.b16 %v911, %v910
      %v930 = vpack.c.b16 %v913, %v912
      %v931 = vpack.c.b16 %v915, %v914
      %948 = vmatprep.subr.bf16.mxu0 0
      %949 = vmatpush1.bf16.msra.mxu0 %v923
      %950 = vmatprep.subr.bf16.mxu0 0
      %951 = vmatpush1.bf16.msra.mxu0 %v922
      %952 = vmatprep.subr.bf16.mxu0 0
      %953 = vmatpush1.bf16.msra.mxu0 %v921
      %954 = vmatprep.subr.bf16.mxu0 0
      %955 = vmatpush1.bf16.msra.mxu0 %v920
      %956 = vmatprep.subr.bf16.mxu0 0
      %957 = vmatpush1.bf16.msra.mxu0 %v919
      %958 = vmatprep.subr.bf16.mxu0 0
      %959 = vmatpush1.bf16.msra.mxu0 %v918
      %960 = vmatprep.subr.bf16.mxu0 0
      %961 = vmatpush1.bf16.msra.mxu0 %v917
      %962 = vmatprep.subr.bf16.mxu0 0
      %963 = vmatpush1.bf16.msra.mxu0 %v916
      %964 = vmatprep.subr.bf16.mxu0 0
      %965 = vmatpush2.bf16.msra.mxu0 %v931
      %966 = vmatprep.subr.bf16.mxu0 0
      %967 = vmatpush2.bf16.msra.mxu0 %v930
      %968 = vmatprep.subr.bf16.mxu0 0
      %969 = vmatpush2.bf16.msra.mxu0 %v929
      %970 = vmatprep.subr.bf16.mxu0 0
      %971 = vmatpush2.bf16.msra.mxu0 %v928
      %972 = vmatprep.subr.bf16.mxu0 0
      %973 = vmatpush2.bf16.msra.mxu0 %v927
      %974 = vmatprep.subr.bf16.mxu0 0
      %975 = vmatpush2.bf16.msra.mxu0 %v926
      %976 = vmatprep.subr.bf16.mxu0 0
      %977 = vmatpush2.bf16.msra.mxu0 %v925
      %978 = vmatprep.subr.bf16.mxu0 0
      %979 = vmatpush2.bf16.msra.mxu0 %v924
      %980 = vmatprep.mubr.bf16.mxu0 %v798
      %981 = vmatmul.mubr.bf16.gmra.mxu0 %v797
      %v982 = vpop.f32.mrf.mxu0
      %v983 = vadd.f32 %v850, %v982
      %v984 = vpop.f32.mrf.mxu0
      %v985 = vpop.f32.mrf.mxu0
      %v986 = vadd.f32 %v850, %v985
      %v987 = vpop.f32.mrf.mxu0
      %988 = vmatprep.mubr.bf16.mxu0 %v800
      %989 = vmatmul.mubr.bf16.gmra.mxu0 %v799
      %v990 = vpop.f32.mrf.mxu0
      %v991 = vadd.f32 %v850, %v990
      %v992 = vpop.f32.mrf.mxu0
      %v993 = vpop.f32.mrf.mxu0
      %v994 = vadd.f32 %v850, %v993
      %v995 = vpop.f32.mrf.mxu0
      %996 = vmatprep.mubr.bf16.mxu0 %v802
      %997 = vmatmul.mubr.bf16.gmra.mxu0 %v801
      %v998 = vpop.f32.mrf.mxu0
      %v999 = vadd.f32 %v850, %v998
      %v1000 = vpop.f32.mrf.mxu0
      %v1001 = vpop.f32.mrf.mxu0
      %v1002 = vadd.f32 %v850, %v1001
      %v1003 = vpop.f32.mrf.mxu0
      %1004 = vmatprep.mubr.bf16.mxu0 %v804
      %1005 = vmatmul.mubr.bf16.gmra.mxu0 %v803
      %v1006 = vpop.f32.mrf.mxu0
      %v1007 = vadd.f32 %v850, %v1006
      %v1008 = vpop.f32.mrf.mxu0
      %v1009 = vpop.f32.mrf.mxu0
      %v1010 = vadd.f32 %v850, %v1009
      %v1011 = vpop.f32.mrf.mxu0
      %1012 = vmatprep.mubr.bf16.mxu0 %v806
      %1013 = vmatmul.mubr.bf16.gmra.mxu0 %v805
      %v1014 = vpop.f32.mrf.mxu0
      %v1015 = vadd.f32 %v850, %v1014
      %v1016 = vpop.f32.mrf.mxu0
      %v1017 = vpop.f32.mrf.mxu0
      %v1018 = vadd.f32 %v850, %v1017
      %v1019 = vpop.f32.mrf.mxu0
      %1020 = vmatprep.mubr.bf16.mxu0 %v808
      %1021 = vmatmul.mubr.bf16.gmra.mxu0 %v807
      %v1022 = vpop.f32.mrf.mxu0
      %v1023 = vadd.f32 %v850, %v1022
      %v1024 = vpop.f32.mrf.mxu0
      %v1025 = vpop.f32.mrf.mxu0
      %v1026 = vadd.f32 %v850, %v1025
      %v1027 = vpop.f32.mrf.mxu0
      %1028 = vmatprep.mubr.bf16.mxu0 %v810
      %1029 = vmatmul.mubr.bf16.gmra.mxu0 %v809
      %v1030 = vpop.f32.mrf.mxu0
      %v1031 = vadd.f32 %v850, %v1030
      %v1032 = vpop.f32.mrf.mxu0
      %v1033 = vpop.f32.mrf.mxu0
      %v1034 = vadd.f32 %v850, %v1033
      %v1035 = vpop.f32.mrf.mxu0
      %1036 = vmatprep.mubr.bf16.mxu0 %v812
      %1037 = vmatmul.mubr.bf16.gmra.mxu0 %v811
      %v1038 = vpop.f32.mrf.mxu0
      %v1039 = vadd.f32 %v850, %v1038
      %v1040 = vpop.f32.mrf.mxu0
      %v1041 = vpop.f32.mrf.mxu0
      %v1042 = vadd.f32 %v850, %v1041
      %v1043 = vpop.f32.mrf.mxu0
      %1044 = vdwg.mxu0
      %v1045 = vmax.f32 %v983, 0.0
      %v1046 = vmax.f32 %v986, 0.0
      %v1047 = vmax.f32 %v991, 0.0
      %v1048 = vmax.f32 %v994, 0.0
      %v1049 = vmax.f32 %v999, 0.0
      %v1050 = vmax.f32 %v1002, 0.0
      %v1051 = vmax.f32 %v1007, 0.0
      %v1052 = vmax.f32 %v1010, 0.0
      %v1053 = vmax.f32 %v1015, 0.0
      %v1054 = vmax.f32 %v1018, 0.0
      %v1055 = vmax.f32 %v1023, 0.0
      %v1056 = vmax.f32 %v1026, 0.0
      %v1057 = vmax.f32 %v1031, 0.0
      %v1058 = vmax.f32 %v1034, 0.0
      %v1059 = vmax.f32 %v1039, 0.0
      %v1060 = vmax.f32 %v1042, 0.0
      %v1061 = vpack.c.bf16 %v1046, %v1045
      %v1062 = vpack.c.bf16 %v1048, %v1047
      %v1063 = vpack.c.bf16 %v1050, %v1049
      %v1064 = vpack.c.bf16 %v1052, %v1051
      %v1065 = vpack.c.bf16 %v1054, %v1053
      %v1066 = vpack.c.bf16 %v1056, %v1055
      %v1067 = vpack.c.bf16 %v1058, %v1057
      %v1068 = vpack.c.bf16 %v1060, %v1059
      %v1069 = vld [vmem:[%s6] sm:$0xf]
      %v1070 = vld [vmem:[%s6 + $0x4] sm:$0xf]
      %v1071 = vld [vmem:[%s6 + $0x8] sm:$0xf]
      %v1072 = vld [vmem:[%s6 + $0xc] sm:$0xf]
      %v1073 = vld [vmem:[%s6 + $0x10] sm:$0xf]
      %v1074 = vld [vmem:[%s6 + $0x14] sm:$0xf]
      %v1075 = vld [vmem:[%s6 + $0x18] sm:$0xf]
      %v1076 = vld [vmem:[%s6 + $0x1c] sm:$0xf]
      %v1077 = vld [vmem:[%s6 + $0x20] sm:$0xf]
      %v1078 = vld [vmem:[%s6 + $0x24] sm:$0xf]
      %v1079 = vld [vmem:[%s6 + $0x28] sm:$0xf]
      %v1080 = vld [vmem:[%s6 + $0x2c] sm:$0xf]
      %v1081 = vld [vmem:[%s6 + $0x30] sm:$0xf]
      %v1082 = vld [vmem:[%s6 + $0x34] sm:$0xf]
      %v1083 = vld [vmem:[%s6 + $0x38] sm:$0xf]
      %v1084 = vld [vmem:[%s6 + $0x3c] sm:$0xf]
      %v1085 = vld [vmem:[%s7] sm:$0x1]
      %v1087 = vlaneseq
      %v1088 = vshrl.u32 %v1087, 7
      %v1089 = vsub.s32 0, %v1088
      %v1090 = vrot.slane %v1085, %v1089
      %v1108 = vunpack.c.l.b16 %v1069
      %v1109 = vunpack.c.l.b16 %v1070
      %v1110 = vunpack.c.l.b16 %v1071
      %v1111 = vunpack.c.l.b16 %v1072
      %v1112 = vunpack.c.l.b16 %v1073
      %v1113 = vunpack.c.l.b16 %v1074
      %v1114 = vunpack.c.l.b16 %v1075
      %v1115 = vunpack.c.l.b16 %v1076
      %v1116 = vunpack.c.l.b16 %v1077
      %v1117 = vunpack.c.l.b16 %v1078
      %v1118 = vunpack.c.l.b16 %v1079
      %v1119 = vunpack.c.l.b16 %v1080
      %v1120 = vunpack.c.l.b16 %v1081
      %v1121 = vunpack.c.l.b16 %v1082
      %v1122 = vunpack.c.l.b16 %v1083
      %v1123 = vunpack.c.l.b16 %v1084
      %v1124 = vpack.c.b16 %v1109, %v1108
      %v1125 = vpack.c.b16 %v1111, %v1110
      %v1126 = vpack.c.b16 %v1113, %v1112
      %v1127 = vpack.c.b16 %v1115, %v1114
      %v1128 = vpack.c.b16 %v1117, %v1116
      %v1129 = vpack.c.b16 %v1119, %v1118
      %v1130 = vpack.c.b16 %v1121, %v1120
      %v1131 = vpack.c.b16 %v1123, %v1122
      %1140 = vmatprep.subr.bf16.mxu0 0
      %1141 = vmatpush1.bf16.msra.mxu0 %v1131
      %1142 = vmatprep.subr.bf16.mxu0 0
      %1143 = vmatpush1.bf16.msra.mxu0 %v1130
      %1144 = vmatprep.subr.bf16.mxu0 0
      %1145 = vmatpush1.bf16.msra.mxu0 %v1129
      %1146 = vmatprep.subr.bf16.mxu0 0
      %1147 = vmatpush1.bf16.msra.mxu0 %v1128
      %1148 = vmatprep.subr.bf16.mxu0 0
      %1149 = vmatpush1.bf16.msra.mxu0 %v1127
      %1150 = vmatprep.subr.bf16.mxu0 0
      %1151 = vmatpush1.bf16.msra.mxu0 %v1126
      %1152 = vmatprep.subr.bf16.mxu0 0
      %1153 = vmatpush1.bf16.msra.mxu0 %v1125
      %1154 = vmatprep.subr.bf16.mxu0 0
      %1155 = vmatpush1.bf16.msra.mxu0 %v1124
      %1156 = vmatprep.subr.bf16.mxu0 0
      %1157 = vmatpush2.bf16.msra.mxu0 0
      %1158 = vmatprep.subr.bf16.mxu0 0
      %1159 = vmatpush2.bf16.msra.mxu0 0
      %1160 = vmatprep.subr.bf16.mxu0 0
      %1161 = vmatpush2.bf16.msra.mxu0 0
      %1162 = vmatprep.subr.bf16.mxu0 0
      %1163 = vmatpush2.bf16.msra.mxu0 0
      %1164 = vmatprep.subr.bf16.mxu0 0
      %1165 = vmatpush2.bf16.msra.mxu0 0
      %1166 = vmatprep.subr.bf16.mxu0 0
      %1167 = vmatpush2.bf16.msra.mxu0 0
      %1168 = vmatprep.subr.bf16.mxu0 0
      %1169 = vmatpush2.bf16.msra.mxu0 0
      %1170 = vmatprep.subr.bf16.mxu0 0
      %1171 = vmatpush2.bf16.msra.mxu0 0
      %1172 = vmatprep.mubr.bf16.mxu0 0
      %1173 = vmatmul.mubr.bf16.gmra.mxu0 %v1061
      %v1174 = vpop.f32.mrf.mxu0
      %v1175 = vadd.f32 %v1090, %v1174
      %v1176 = vpop.f32.mrf.mxu0
      %v1177 = vpop.f32.mrf.mxu0
      %v1178 = vadd.f32 %v1090, %v1177
      %v1179 = vpop.f32.mrf.mxu0
      %1180 = vmatprep.mubr.bf16.mxu0 0
      %1181 = vmatmul.mubr.bf16.gmra.mxu0 %v1062
      %v1182 = vpop.f32.mrf.mxu0
      %v1183 = vadd.f32 %v1090, %v1182
      %v1184 = vpop.f32.mrf.mxu0
      %v1185 = vpop.f32.mrf.mxu0
      %v1186 = vadd.f32 %v1090, %v1185
      %v1187 = vpop.f32.mrf.mxu0
      %1188 = vmatprep.mubr.bf16.mxu0 0
      %1189 = vmatmul.mubr.bf16.gmra.mxu0 %v1063
      %v1190 = vpop.f32.mrf.mxu0
      %v1191 = vadd.f32 %v1090, %v1190
      %v1192 = vpop.f32.mrf.mxu0
      %v1193 = vpop.f32.mrf.mxu0
      %v1194 = vadd.f32 %v1090, %v1193
      %v1195 = vpop.f32.mrf.mxu0
      %1196 = vmatprep.mubr.bf16.mxu0 0
      %1197 = vmatmul.mubr.bf16.gmra.mxu0 %v1064
      %v1198 = vpop.f32.mrf.mxu0
      %v1199 = vadd.f32 %v1090, %v1198
      %v1200 = vpop.f32.mrf.mxu0
      %v1201 = vpop.f32.mrf.mxu0
      %v1202 = vadd.f32 %v1090, %v1201
      %v1203 = vpop.f32.mrf.mxu0
      %1204 = vmatprep.mubr.bf16.mxu0 0
      %1205 = vmatmul.mubr.bf16.gmra.mxu0 %v1065
      %v1206 = vpop.f32.mrf.mxu0
      %v1207 = vadd.f32 %v1090, %v1206
      %v1208 = vpop.f32.mrf.mxu0
      %v1209 = vpop.f32.mrf.mxu0
      %v1210 = vadd.f32 %v1090, %v1209
      %v1211 = vpop.f32.mrf.mxu0
      %1212 = vmatprep.mubr.bf16.mxu0 0
      %1213 = vmatmul.mubr.bf16.gmra.mxu0 %v1066
      %v1214 = vpop.f32.mrf.mxu0
      %v1215 = vadd.f32 %v1090, %v1214
      %v1216 = vpop.f32.mrf.mxu0
      %v1217 = vpop.f32.mrf.mxu0
      %v1218 = vadd.f32 %v1090, %v1217
      %v1219 = vpop.f32.mrf.mxu0
      %1220 = vmatprep.mubr.bf16.mxu0 0
      %1221 = vmatmul.mubr.bf16.gmra.mxu0 %v1067
      %v1222 = vpop.f32.mrf.mxu0
      %v1223 = vadd.f32 %v1090, %v1222
      %v1224 = vpop.f32.mrf.mxu0
      %v1225 = vpop.f32.mrf.mxu0
      %v1226 = vadd.f32 %v1090, %v1225
      %v1227 = vpop.f32.mrf.mxu0
      %1228 = vmatprep.mubr.bf16.mxu0 0
      %1229 = vmatmul.mubr.bf16.gmra.mxu0 %v1068
      %v1230 = vpop.f32.mrf.mxu0
      %v1231 = vadd.f32 %v1090, %v1230
      %v1232 = vpop.f32.mrf.mxu0
      %v1233 = vpop.f32.mrf.mxu0
      %v1234 = vadd.f32 %v1090, %v1233
      %v1235 = vpop.f32.mrf.mxu0
      %1236 = vdwg.mxu0
      %v1237 = vld [vmem:[%s520] sm:$0xff]
      %v1238 = vld [vmem:[%s520 + $0x8] sm:$0xff]
      %v1239 = vld [vmem:[%s520 + $0x10] sm:$0xff]
      %v1240 = vld [vmem:[%s520 + $0x18] sm:$0xff]
      %v1241 = vld [vmem:[%s520 + $0x20] sm:$0xff]
      %v1242 = vld [vmem:[%s520 + $0x28] sm:$0xff]
      %v1243 = vld [vmem:[%s520 + $0x30] sm:$0xff]
      %v1244 = vld [vmem:[%s520 + $0x38] sm:$0xff]
      %v1245 = vld [vmem:[%s520 + $0x40] sm:$0xff]
      %v1246 = vld [vmem:[%s520 + $0x48] sm:$0xff]
      %v1247 = vld [vmem:[%s520 + $0x50] sm:$0xff]
      %v1248 = vld [vmem:[%s520 + $0x58] sm:$0xff]
      %v1249 = vld [vmem:[%s520 + $0x60] sm:$0xff]
      %v1250 = vld [vmem:[%s520 + $0x68] sm:$0xff]
      %v1251 = vld [vmem:[%s520 + $0x70] sm:$0xff]
      %v1252 = vld [vmem:[%s520 + $0x78] sm:$0xff]
      %v1253 = vmul.f32 %v1175, 0.5
      %v1254 = vmul.f32 %v1178, 0.5
      %v1255 = vmul.f32 %v1183, 0.5
      %v1256 = vmul.f32 %v1186, 0.5
      %v1257 = vmul.f32 %v1191, 0.5
      %v1258 = vmul.f32 %v1194, 0.5
      %v1259 = vmul.f32 %v1199, 0.5
      %v1260 = vmul.f32 %v1202, 0.5
      %v1261 = vmul.f32 %v1207, 0.5
      %v1262 = vmul.f32 %v1210, 0.5
      %v1263 = vmul.f32 %v1215, 0.5
      %v1264 = vmul.f32 %v1218, 0.5
      %v1265 = vmul.f32 %v1223, 0.5
      %v1266 = vmul.f32 %v1226, 0.5
      %v1267 = vmul.f32 %v1231, 0.5
      %v1268 = vmul.f32 %v1234, 0.5
      %v1269 = vmul.f32 %v1253, 1.442695
      %v1270 = vpow.pop %v1269
      %v1271 = vmul.f32 %v1254, 1.442695
      %v1272 = vpow.pop %v1271
      %v1273 = vmul.f32 %v1255, 1.442695
      %v1274 = vpow.pop %v1273
      %v1275 = vmul.f32 %v1256, 1.442695
      %v1276 = vpow.pop %v1275
      %v1277 = vmul.f32 %v1257, 1.442695
      %v1278 = vpow.pop %v1277
      %v1279 = vmul.f32 %v1258, 1.442695
      %v1280 = vpow.pop %v1279
      %v1281 = vmul.f32 %v1259, 1.442695
      %v1282 = vpow.pop %v1281
      %v1283 = vmul.f32 %v1260, 1.442695
      %v1284 = vpow.pop %v1283
      %v1285 = vmul.f32 %v1261, 1.442695
      %v1286 = vpow.pop %v1285
      %v1287 = vmul.f32 %v1262, 1.442695
      %v1288 = vpow.pop %v1287
      %v1289 = vmul.f32 %v1263, 1.442695
      %v1290 = vpow.pop %v1289
      %v1291 = vmul.f32 %v1264, 1.442695
      %v1292 = vpow.pop %v1291
      %v1293 = vmul.f32 %v1265, 1.442695
      %v1294 = vpow.pop %v1293
      %v1295 = vmul.f32 %v1266, 1.442695
      %v1296 = vpow.pop %v1295
      %v1297 = vmul.f32 %v1267, 1.442695
      %v1298 = vpow.pop %v1297
      %v1299 = vmul.f32 %v1268, 1.442695
      %v1300 = vpow.pop %v1299
      %1317 = vrot.lane.b32.xlu0 %v1270, 120
      %v1318 = vpop.permute.xlu0 %1317
      %1319 = vrot.lane.b32.xlu0 %v1272, 120
      %v1320 = vpop.permute.xlu0 %1319
      %1321 = vrot.lane.b32.xlu0 %v1274, 120
      %v1322 = vpop.permute.xlu0 %1321
      %1323 = vrot.lane.b32.xlu0 %v1276, 120
      %v1324 = vpop.permute.xlu0 %1323
      %1325 = vrot.lane.b32.xlu0 %v1278, 120
      %v1326 = vpop.permute.xlu0 %1325
      %1327 = vrot.lane.b32.xlu0 %v1280, 120
      %v1328 = vpop.permute.xlu0 %1327
      %1329 = vrot.lane.b32.xlu0 %v1282, 120
      %v1330 = vpop.permute.xlu0 %1329
      %1331 = vrot.lane.b32.xlu0 %v1284, 120
      %v1332 = vpop.permute.xlu0 %1331
      %1333 = vrot.lane.b32.xlu0 %v1286, 120
      %v1334 = vpop.permute.xlu0 %1333
      %1335 = vrot.lane.b32.xlu0 %v1288, 120
      %v1336 = vpop.permute.xlu0 %1335
      %1337 = vrot.lane.b32.xlu0 %v1290, 120
      %v1338 = vpop.permute.xlu0 %1337
      %1339 = vrot.lane.b32.xlu0 %v1292, 120
      %v1340 = vpop.permute.xlu0 %1339
      %1341 = vrot.lane.b32.xlu0 %v1294, 120
      %v1342 = vpop.permute.xlu0 %1341
      %1343 = vrot.lane.b32.xlu0 %v1296, 120
      %v1344 = vpop.permute.xlu0 %1343
      %1345 = vrot.lane.b32.xlu0 %v1298, 120
      %v1346 = vpop.permute.xlu0 %1345
      %1347 = vrot.lane.b32.xlu0 %v1300, 120
      %v1348 = vpop.permute.xlu0 %1347
      %v1365 = vmul.f32 %v1237, %v1318
      %v1366 = vmul.f32 %v1238, %v1320
      %v1367 = vmul.f32 %v1239, %v1322
      %v1368 = vmul.f32 %v1240, %v1324
      %v1369 = vmul.f32 %v1241, %v1326
      %v1370 = vmul.f32 %v1242, %v1328
      %v1371 = vmul.f32 %v1243, %v1330
      %v1372 = vmul.f32 %v1244, %v1332
      %v1373 = vmul.f32 %v1245, %v1334
      %v1374 = vmul.f32 %v1246, %v1336
      %v1375 = vmul.f32 %v1247, %v1338
      %v1376 = vmul.f32 %v1248, %v1340
      %v1377 = vmul.f32 %v1249, %v1342
      %v1378 = vmul.f32 %v1250, %v1344
      %v1379 = vmul.f32 %v1251, %v1346
      %v1380 = vmul.f32 %v1252, %v1348
      %v1381 = vadd.f32 %v1175, %v1365
      %v1382 = vadd.f32 %v1178, %v1366
      %v1383 = vadd.f32 %v1183, %v1367
      %v1384 = vadd.f32 %v1186, %v1368
      %v1385 = vadd.f32 %v1191, %v1369
      %v1386 = vadd.f32 %v1194, %v1370
      %v1387 = vadd.f32 %v1199, %v1371
      %v1388 = vadd.f32 %v1202, %v1372
      %v1389 = vadd.f32 %v1207, %v1373
      %v1390 = vadd.f32 %v1210, %v1374
      %v1391 = vadd.f32 %v1215, %v1375
      %v1392 = vadd.f32 %v1218, %v1376
      %v1393 = vadd.f32 %v1223, %v1377
      %v1394 = vadd.f32 %v1226, %v1378
      %v1395 = vadd.f32 %v1231, %v1379
      %v1396 = vadd.f32 %v1234, %v1380
      %v1397 = vpack.c.bf16 %v1382, %v1381
      %v1398 = vpack.c.bf16 %v1384, %v1383
      %v1399 = vpack.c.bf16 %v1386, %v1385
      %v1400 = vpack.c.bf16 %v1388, %v1387
      %v1401 = vpack.c.bf16 %v1390, %v1389
      %v1402 = vpack.c.bf16 %v1392, %v1391
      %v1403 = vpack.c.bf16 %v1394, %v1393
      %v1404 = vpack.c.bf16 %v1396, %v1395
      %v1405 = vld [vmem:[%s8] sm:$0xf]
      %v1406 = vld [vmem:[%s9] sm:$0x1]
      %v1408 = vlaneseq
      %v1409 = vshrl.u32 %v1408, 7
      %v1410 = vsub.s32 0, %v1409
      %v1411 = vrot.slane %v1406, %v1410
      %vm1413 = vcmask 64512
      %v1415 = vsel %vm1413, %v1397, 0
      %v1418 = vsel %vm1413, %v1398, 0
      %v1421 = vsel %vm1413, %v1399, 0
      %v1424 = vsel %vm1413, %v1400, 0
      %v1427 = vsel %vm1413, %v1401, 0
      %v1430 = vsel %vm1413, %v1402, 0
      %v1433 = vsel %vm1413, %v1403, 0
      %v1436 = vsel %vm1413, %v1404, 0
      %vm1438 = vcmask 1043456
      %v1440 = vsel %vm1438, %v1405, 0
      %1442 = vmatprep.subr.bf16.mxu0 0
      %1443 = vmatpush1.bf16.msra.mxu0 0
      %1444 = vmatprep.subr.bf16.mxu0 0
      %1445 = vmatpush1.bf16.msra.mxu0 0
      %1446 = vmatprep.subr.bf16.mxu0 0
      %1447 = vmatpush1.bf16.msra.mxu0 0
      %1448 = vmatprep.subr.bf16.mxu0 0
      %1449 = vmatpush1.bf16.msra.mxu0 0
      %1450 = vmatprep.subr.bf16.mxu0 0
      %1451 = vmatpush1.bf16.msra.mxu0 0
      %1452 = vmatprep.subr.bf16.mxu0 0
      %1453 = vmatpush1.bf16.msra.mxu0 0
      %1454 = vmatprep.subr.bf16.mxu0 0
      %1455 = vmatpush1.bf16.msra.mxu0 0
      %1456 = vmatprep.subr.bf16.mxu0 0
      %1457 = vmatpush1.bf16.msra.mxu0 %v1440
      %1458 = vmatprep.subr.bf16.mxu0 0
      %1459 = vmatpush2.bf16.msra.mxu0 0
      %1460 = vmatprep.subr.bf16.mxu0 0
      %1461 = vmatpush2.bf16.msra.mxu0 0
      %1462 = vmatprep.subr.bf16.mxu0 0
      %1463 = vmatpush2.bf16.msra.mxu0 0
      %1464 = vmatprep.subr.bf16.mxu0 0
      %1465 = vmatpush2.bf16.msra.mxu0 0
      %1466 = vmatprep.subr.bf16.mxu0 0
      %1467 = vmatpush2.bf16.msra.mxu0 0
      %1468 = vmatprep.subr.bf16.mxu0 0
      %1469 = vmatpush2.bf16.msra.mxu0 0
      %1470 = vmatprep.subr.bf16.mxu0 0
      %1471 = vmatpush2.bf16.msra.mxu0 0
      %1472 = vmatprep.subr.bf16.mxu0 0
      %1473 = vmatpush2.bf16.msra.mxu0 0
      %1474 = vmatprep.mubr.bf16.mxu0 0
      %1475 = vmatmul.mubr.bf16.gmra.mxu0 %v1415
      %v1476 = vpop.f32.mrf.mxu0
      %v1477 = vadd.f32 %v1411, %v1476
      %v1478 = vpop.f32.mrf.mxu0
      %v1479 = vpop.f32.mrf.mxu0
      %v1480 = vadd.f32 %v1411, %v1479
      %v1481 = vpop.f32.mrf.mxu0
      %1482 = vmatprep.mubr.bf16.mxu0 0
      %1483 = vmatmul.mubr.bf16.gmra.mxu0 %v1418
      %v1484 = vpop.f32.mrf.mxu0
      %v1485 = vadd.f32 %v1411, %v1484
      %v1486 = vpop.f32.mrf.mxu0
      %v1487 = vpop.f32.mrf.mxu0
      %v1488 = vadd.f32 %v1411, %v1487
      %v1489 = vpop.f32.mrf.mxu0
      %1490 = vmatprep.mubr.bf16.mxu0 0
      %1491 = vmatmul.mubr.bf16.gmra.mxu0 %v1421
      %v1492 = vpop.f32.mrf.mxu0
      %v1493 = vadd.f32 %v1411, %v1492
      %v1494 = vpop.f32.mrf.mxu0
      %v1495 = vpop.f32.mrf.mxu0
      %v1496 = vadd.f32 %v1411, %v1495
      %v1497 = vpop.f32.mrf.mxu0
      %1498 = vmatprep.mubr.bf16.mxu0 0
      %1499 = vmatmul.mubr.bf16.gmra.mxu0 %v1424
      %v1500 = vpop.f32.mrf.mxu0
      %v1501 = vadd.f32 %v1411, %v1500
      %v1502 = vpop.f32.mrf.mxu0
      %v1503 = vpop.f32.mrf.mxu0
      %v1504 = vadd.f32 %v1411, %v1503
      %v1505 = vpop.f32.mrf.mxu0
      %1506 = vmatprep.mubr.bf16.mxu0 0
      %1507 = vmatmul.mubr.bf16.gmra.mxu0 %v1427
      %v1508 = vpop.f32.mrf.mxu0
      %v1509 = vadd.f32 %v1411, %v1508
      %v1510 = vpop.f32.mrf.mxu0
      %v1511 = vpop.f32.mrf.mxu0
      %v1512 = vadd.f32 %v1411, %v1511
      %v1513 = vpop.f32.mrf.mxu0
      %1514 = vmatprep.mubr.bf16.mxu0 0
      %1515 = vmatmul.mubr.bf16.gmra.mxu0 %v1430
      %v1516 = vpop.f32.mrf.mxu0
      %v1517 = vadd.f32 %v1411, %v1516
      %v1518 = vpop.f32.mrf.mxu0
      %v1519 = vpop.f32.mrf.mxu0
      %v1520 = vadd.f32 %v1411, %v1519
      %v1521 = vpop.f32.mrf.mxu0
      %1522 = vmatprep.mubr.bf16.mxu0 0
      %1523 = vmatmul.mubr.bf16.gmra.mxu0 %v1433
      %v1524 = vpop.f32.mrf.mxu0
      %v1525 = vadd.f32 %v1411, %v1524
      %v1526 = vpop.f32.mrf.mxu0
      %v1527 = vpop.f32.mrf.mxu0
      %v1528 = vadd.f32 %v1411, %v1527
      %v1529 = vpop.f32.mrf.mxu0
      %1530 = vmatprep.mubr.bf16.mxu0 0
      %1531 = vmatmul.mubr.bf16.gmra.mxu0 %v1436
      %v1532 = vpop.f32.mrf.mxu0
      %v1533 = vadd.f32 %v1411, %v1532
      %v1534 = vpop.f32.mrf.mxu0
      %v1535 = vpop.f32.mrf.mxu0
      %v1536 = vadd.f32 %v1411, %v1535
      %v1537 = vpop.f32.mrf.mxu0
      %1538 = vdwg.mxu0
      %v1539 = vmax.f32 %v1477, 0.0
      %v1540 = vmax.f32 %v1480, 0.0
      %v1541 = vmax.f32 %v1485, 0.0
      %v1542 = vmax.f32 %v1488, 0.0
      %v1543 = vmax.f32 %v1493, 0.0
      %v1544 = vmax.f32 %v1496, 0.0
      %v1545 = vmax.f32 %v1501, 0.0
      %v1546 = vmax.f32 %v1504, 0.0
      %v1547 = vmax.f32 %v1509, 0.0
      %v1548 = vmax.f32 %v1512, 0.0
      %v1549 = vmax.f32 %v1517, 0.0
      %v1550 = vmax.f32 %v1520, 0.0
      %v1551 = vmax.f32 %v1525, 0.0
      %v1552 = vmax.f32 %v1528, 0.0
      %v1553 = vmax.f32 %v1533, 0.0
      %v1554 = vmax.f32 %v1536, 0.0
      %v1555 = vpack.c.bf16 %v1540, %v1539
      %v1556 = vpack.c.bf16 %v1542, %v1541
      %v1557 = vpack.c.bf16 %v1544, %v1543
      %v1558 = vpack.c.bf16 %v1546, %v1545
      %v1559 = vpack.c.bf16 %v1548, %v1547
      %v1560 = vpack.c.bf16 %v1550, %v1549
      %v1561 = vpack.c.bf16 %v1552, %v1551
      %v1562 = vpack.c.bf16 %v1554, %v1553
      %v1563 = vld [vmem:[%s10] sm:$0xff]
      %v1564 = vld [vmem:[%s10 + $0x8] sm:$0xff]
      %v1565 = vld [vmem:[%s10 + $0x10] sm:$0xff]
      %v1566 = vld [vmem:[%s10 + $0x18] sm:$0xff]
      %v1567 = vld [vmem:[%s10 + $0x20] sm:$0xff]
      %v1568 = vld [vmem:[%s10 + $0x28] sm:$0xff]
      %v1569 = vld [vmem:[%s10 + $0x30] sm:$0xff]
      %v1570 = vld [vmem:[%s10 + $0x38] sm:$0xff]
      %v1571 = vld [vmem:[%s10 + $0x40] sm:$0xff]
      %v1572 = vld [vmem:[%s10 + $0x48] sm:$0xff]
      %v1573 = vld [vmem:[%s10 + $0x50] sm:$0xff]
      %v1574 = vld [vmem:[%s10 + $0x58] sm:$0xff]
      %v1575 = vld [vmem:[%s10 + $0x60] sm:$0xff]
      %v1576 = vld [vmem:[%s10 + $0x68] sm:$0xff]
      %v1577 = vld [vmem:[%s10 + $0x70] sm:$0xff]
      %v1578 = vld [vmem:[%s10 + $0x78] sm:$0xff]
      %v1579 = vld [vmem:[%s11] sm:$0x3]
      %v1581 = vlaneseq
      %v1582 = vshrl.u32 %v1581, 7
      %v1583 = vsub.s32 0, %v1582
      %v1584 = vrot.slane %v1579, %v1583
      %v1585 = vlaneseq
      %v1586 = vshrl.u32 %v1585, 7
      %v1587 = vsub.s32 1, %v1586
      %v1588 = vrot.slane %v1579, %v1587
      %v1607 = vunpack.c.l.b16 %v1563
      %v1608 = vunpack.c.h.b16 %v1563
      %v1609 = vunpack.c.l.b16 %v1564
      %v1610 = vunpack.c.h.b16 %v1564
      %v1611 = vunpack.c.l.b16 %v1565
      %v1612 = vunpack.c.h.b16 %v1565
      %v1613 = vunpack.c.l.b16 %v1566
      %v1614 = vunpack.c.h.b16 %v1566
      %v1615 = vunpack.c.l.b16 %v1567
      %v1616 = vunpack.c.h.b16 %v1567
      %v1617 = vunpack.c.l.b16 %v1568
      %v1618 = vunpack.c.h.b16 %v1568
      %v1619 = vunpack.c.l.b16 %v1569
      %v1620 = vunpack.c.h.b16 %v1569
      %v1621 = vunpack.c.l.b16 %v1570
      %v1622 = vunpack.c.h.b16 %v1570
      %v1623 = vunpack.c.l.b16 %v1571
      %v1624 = vunpack.c.h.b16 %v1571
      %v1625 = vunpack.c.l.b16 %v1572
      %v1626 = vunpack.c.h.b16 %v1572
      %v1627 = vunpack.c.l.b16 %v1573
      %v1628 = vunpack.c.h.b16 %v1573
      %v1629 = vunpack.c.l.b16 %v1574
      %v1630 = vunpack.c.h.b16 %v1574
      %v1631 = vunpack.c.l.b16 %v1575
      %v1632 = vunpack.c.h.b16 %v1575
      %v1633 = vunpack.c.l.b16 %v1576
      %v1634 = vunpack.c.h.b16 %v1576
      %v1635 = vunpack.c.l.b16 %v1577
      %v1636 = vunpack.c.h.b16 %v1577
      %v1637 = vunpack.c.l.b16 %v1578
      %v1638 = vunpack.c.h.b16 %v1578
      %v1639 = vpack.c.b16 %v1609, %v1607
      %v1640 = vpack.c.b16 %v1610, %v1608
      %v1641 = vpack.c.b16 %v1613, %v1611
      %v1642 = vpack.c.b16 %v1614, %v1612
      %v1643 = vpack.c.b16 %v1617, %v1615
      %v1644 = vpack.c.b16 %v1618, %v1616
      %v1645 = vpack.c.b16 %v1621, %v1619
      %v1646 = vpack.c.b16 %v1622, %v1620
      %v1647 = vpack.c.b16 %v1625, %v1623
      %v1648 = vpack.c.b16 %v1626, %v1624
      %v1649 = vpack.c.b16 %v1629, %v1627
      %v1650 = vpack.c.b16 %v1630, %v1628
      %v1651 = vpack.c.b16 %v1633, %v1631
      %v1652 = vpack.c.b16 %v1634, %v1632
      %v1653 = vpack.c.b16 %v1637, %v1635
      %v1654 = vpack.c.b16 %v1638, %v1636
      %1671 = vmatprep.subr.bf16.mxu0 %v1654
      %1672 = vmatpush1.bf16.msra.mxu0 %v1653
      %1673 = vmatprep.subr.bf16.mxu0 %v1652
      %1674 = vmatpush1.bf16.msra.mxu0 %v1651
      %1675 = vmatprep.subr.bf16.mxu0 %v1650
      %1676 = vmatpush1.bf16.msra.mxu0 %v1649
      %1677 = vmatprep.subr.bf16.mxu0 %v1648
      %1678 = vmatpush1.bf16.msra.mxu0 %v1647
      %1679 = vmatprep.subr.bf16.mxu0 %v1646
      %1680 = vmatpush1.bf16.msra.mxu0 %v1645
      %1681 = vmatprep.subr.bf16.mxu0 %v1644
      %1682 = vmatpush1.bf16.msra.mxu0 %v1643
      %1683 = vmatprep.subr.bf16.mxu0 %v1642
      %1684 = vmatpush1.bf16.msra.mxu0 %v1641
      %1685 = vmatprep.subr.bf16.mxu0 %v1640
      %1686 = vmatpush1.bf16.msra.mxu0 %v1639
      %1687 = vmatprep.subr.bf16.mxu0 0
      %1688 = vmatpush2.bf16.msra.mxu0 0
      %1689 = vmatprep.subr.bf16.mxu0 0
      %1690 = vmatpush2.bf16.msra.mxu0 0
      %1691 = vmatprep.subr.bf16.mxu0 0
      %1692 = vmatpush2.bf16.msra.mxu0 0
      %1693 = vmatprep.subr.bf16.mxu0 0
      %1694 = vmatpush2.bf16.msra.mxu0 0
      %1695 = vmatprep.subr.bf16.mxu0 0
      %1696 = vmatpush2.bf16.msra.mxu0 0
      %1697 = vmatprep.subr.bf16.mxu0 0
      %1698 = vmatpush2.bf16.msra.mxu0 0
      %1699 = vmatprep.subr.bf16.mxu0 0
      %1700 = vmatpush2.bf16.msra.mxu0 0
      %1701 = vmatprep.subr.bf16.mxu0 0
      %1702 = vmatpush2.bf16.msra.mxu0 0
      %1703 = vmatprep.mubr.bf16.mxu0 0
      %1704 = vmatmul.mubr.bf16.gmra.mxu0 %v1555
      %v1705 = vpop.f32.mrf.mxu0
      %v1706 = vadd.f32 %v1584, %v1705
      %v1707 = vpop.f32.mrf.mxu0
      %v1708 = vadd.f32 %v1588, %v1707
      %v1709 = vpop.f32.mrf.mxu0
      %v1710 = vadd.f32 %v1584, %v1709
      %v1711 = vpop.f32.mrf.mxu0
      %v1712 = vadd.f32 %v1588, %v1711
      %1713 = vmatprep.mubr.bf16.mxu0 0
      %1714 = vmatmul.mubr.bf16.gmra.mxu0 %v1556
      %v1715 = vpop.f32.mrf.mxu0
      %v1716 = vadd.f32 %v1584, %v1715
      %v1717 = vpop.f32.mrf.mxu0
      %v1718 = vadd.f32 %v1588, %v1717
      %v1719 = vpop.f32.mrf.mxu0
      %v1720 = vadd.f32 %v1584, %v1719
      %v1721 = vpop.f32.mrf.mxu0
      %v1722 = vadd.f32 %v1588, %v1721
      %1723 = vmatprep.mubr.bf16.mxu0 0
      %1724 = vmatmul.mubr.bf16.gmra.mxu0 %v1557
      %v1725 = vpop.f32.mrf.mxu0
      %v1726 = vadd.f32 %v1584, %v1725
      %v1727 = vpop.f32.mrf.mxu0
      %v1728 = vadd.f32 %v1588, %v1727
      %v1729 = vpop.f32.mrf.mxu0
      %v1730 = vadd.f32 %v1584, %v1729
      %v1731 = vpop.f32.mrf.mxu0
      %v1732 = vadd.f32 %v1588, %v1731
      %1733 = vmatprep.mubr.bf16.mxu0 0
      %1734 = vmatmul.mubr.bf16.gmra.mxu0 %v1558
      %v1735 = vpop.f32.mrf.mxu0
      %v1736 = vadd.f32 %v1584, %v1735
      %v1737 = vpop.f32.mrf.mxu0
      %v1738 = vadd.f32 %v1588, %v1737
      %v1739 = vpop.f32.mrf.mxu0
      %v1740 = vadd.f32 %v1584, %v1739
      %v1741 = vpop.f32.mrf.mxu0
      %v1742 = vadd.f32 %v1588, %v1741
      %1743 = vmatprep.mubr.bf16.mxu0 0
      %1744 = vmatmul.mubr.bf16.gmra.mxu0 %v1559
      %v1745 = vpop.f32.mrf.mxu0
      %v1746 = vadd.f32 %v1584, %v1745
      %v1747 = vpop.f32.mrf.mxu0
      %v1748 = vadd.f32 %v1588, %v1747
      %v1749 = vpop.f32.mrf.mxu0
      %v1750 = vadd.f32 %v1584, %v1749
      %v1751 = vpop.f32.mrf.mxu0
      %v1752 = vadd.f32 %v1588, %v1751
      %1753 = vmatprep.mubr.bf16.mxu0 0
      %1754 = vmatmul.mubr.bf16.gmra.mxu0 %v1560
      %v1755 = vpop.f32.mrf.mxu0
      %v1756 = vadd.f32 %v1584, %v1755
      %v1757 = vpop.f32.mrf.mxu0
      %v1758 = vadd.f32 %v1588, %v1757
      %v1759 = vpop.f32.mrf.mxu0
      %v1760 = vadd.f32 %v1584, %v1759
      %v1761 = vpop.f32.mrf.mxu0
      %v1762 = vadd.f32 %v1588, %v1761
      %1763 = vmatprep.mubr.bf16.mxu0 0
      %1764 = vmatmul.mubr.bf16.gmra.mxu0 %v1561
      %v1765 = vpop.f32.mrf.mxu0
      %v1766 = vadd.f32 %v1584, %v1765
      %v1767 = vpop.f32.mrf.mxu0
      %v1768 = vadd.f32 %v1588, %v1767
      %v1769 = vpop.f32.mrf.mxu0
      %v1770 = vadd.f32 %v1584, %v1769
      %v1771 = vpop.f32.mrf.mxu0
      %v1772 = vadd.f32 %v1588, %v1771
      %1773 = vmatprep.mubr.bf16.mxu0 0
      %1774 = vmatmul.mubr.bf16.gmra.mxu0 %v1562
      %v1775 = vpop.f32.mrf.mxu0
      %v1776 = vadd.f32 %v1584, %v1775
      %v1777 = vpop.f32.mrf.mxu0
      %v1778 = vadd.f32 %v1588, %v1777
      %v1779 = vpop.f32.mrf.mxu0
      %v1780 = vadd.f32 %v1584, %v1779
      %v1781 = vpop.f32.mrf.mxu0
      %v1782 = vadd.f32 %v1588, %v1781
      %1783 = vdwg.mxu0
      %v1784 = vmax.f32 %v1706, 0.0
      %v1785 = vmax.f32 %v1708, 0.0
      %v1786 = vmax.f32 %v1710, 0.0
      %v1787 = vmax.f32 %v1712, 0.0
      %v1788 = vmax.f32 %v1716, 0.0
      %v1789 = vmax.f32 %v1718, 0.0
      %v1790 = vmax.f32 %v1720, 0.0
      %v1791 = vmax.f32 %v1722, 0.0
      %v1792 = vmax.f32 %v1726, 0.0
      %v1793 = vmax.f32 %v1728, 0.0
      %v1794 = vmax.f32 %v1730, 0.0
      %v1795 = vmax.f32 %v1732, 0.0
      %v1796 = vmax.f32 %v1736, 0.0
      %v1797 = vmax.f32 %v1738, 0.0
      %v1798 = vmax.f32 %v1740, 0.0
      %v1799 = vmax.f32 %v1742, 0.0
      %v1800 = vmax.f32 %v1746, 0.0
      %v1801 = vmax.f32 %v1748, 0.0
      %v1802 = vmax.f32 %v1750, 0.0
      %v1803 = vmax.f32 %v1752, 0.0
      %v1804 = vmax.f32 %v1756, 0.0
      %v1805 = vmax.f32 %v1758, 0.0
      %v1806 = vmax.f32 %v1760, 0.0
      %v1807 = vmax.f32 %v1762, 0.0
      %v1808 = vmax.f32 %v1766, 0.0
      %v1809 = vmax.f32 %v1768, 0.0
      %v1810 = vmax.f32 %v1770, 0.0
      %v1811 = vmax.f32 %v1772, 0.0
      %v1812 = vmax.f32 %v1776, 0.0
      %v1813 = vmax.f32 %v1778, 0.0
      %v1814 = vmax.f32 %v1780, 0.0
      %v1815 = vmax.f32 %v1782, 0.0
      %v1816 = vpack.c.bf16 %v1786, %v1784
      %v1817 = vpack.c.bf16 %v1787, %v1785
      %v1818 = vpack.c.bf16 %v1790, %v1788
      %v1819 = vpack.c.bf16 %v1791, %v1789
      %v1820 = vpack.c.bf16 %v1794, %v1792
      %v1821 = vpack.c.bf16 %v1795, %v1793
      %v1822 = vpack.c.bf16 %v1798, %v1796
      %v1823 = vpack.c.bf16 %v1799, %v1797
      %v1824 = vpack.c.bf16 %v1802, %v1800
      %v1825 = vpack.c.bf16 %v1803, %v1801
      %v1826 = vpack.c.bf16 %v1806, %v1804
      %v1827 = vpack.c.bf16 %v1807, %v1805
      %v1828 = vpack.c.bf16 %v1810, %v1808
      %v1829 = vpack.c.bf16 %v1811, %v1809
      %v1830 = vpack.c.bf16 %v1814, %v1812
      %v1831 = vpack.c.bf16 %v1815, %v1813
      %v1832 = vld [vmem:[%s12] sm:$0xf]
      %v1833 = vld [vmem:[%s12 + $0x4] sm:$0xf]
      %v1834 = vld [vmem:[%s12 + $0x8] sm:$0xf]
      %v1835 = vld [vmem:[%s12 + $0xc] sm:$0xf]
      %v1836 = vld [vmem:[%s12 + $0x10] sm:$0xf]
      %v1837 = vld [vmem:[%s12 + $0x14] sm:$0xf]
      %v1838 = vld [vmem:[%s12 + $0x18] sm:$0xf]
      %v1839 = vld [vmem:[%s12 + $0x1c] sm:$0xf]
      %v1840 = vld [vmem:[%s12 + $0x20] sm:$0xf]
      %v1841 = vld [vmem:[%s12 + $0x24] sm:$0xf]
      %v1842 = vld [vmem:[%s12 + $0x28] sm:$0xf]
      %v1843 = vld [vmem:[%s12 + $0x2c] sm:$0xf]
      %v1844 = vld [vmem:[%s12 + $0x30] sm:$0xf]
      %v1845 = vld [vmem:[%s12 + $0x34] sm:$0xf]
      %v1846 = vld [vmem:[%s12 + $0x38] sm:$0xf]
      %v1847 = vld [vmem:[%s12 + $0x3c] sm:$0xf]
      %v1848 = vld [vmem:[%s12 + $0x40] sm:$0xf]
      %v1849 = vld [vmem:[%s12 + $0x44] sm:$0xf]
      %v1850 = vld [vmem:[%s12 + $0x48] sm:$0xf]
      %v1851 = vld [vmem:[%s12 + $0x4c] sm:$0xf]
      %v1852 = vld [vmem:[%s12 + $0x50] sm:$0xf]
      %v1853 = vld [vmem:[%s12 + $0x54] sm:$0xf]
      %v1854 = vld [vmem:[%s12 + $0x58] sm:$0xf]
      %v1855 = vld [vmem:[%s12 + $0x5c] sm:$0xf]
      %v1856 = vld [vmem:[%s12 + $0x60] sm:$0xf]
      %v1857 = vld [vmem:[%s12 + $0x64] sm:$0xf]
      %v1858 = vld [vmem:[%s12 + $0x68] sm:$0xf]
      %v1859 = vld [vmem:[%s12 + $0x6c] sm:$0xf]
      %v1860 = vld [vmem:[%s12 + $0x70] sm:$0xf]
      %v1861 = vld [vmem:[%s12 + $0x74] sm:$0xf]
      %v1862 = vld [vmem:[%s12 + $0x78] sm:$0xf]
      %v1863 = vld [vmem:[%s12 + $0x7c] sm:$0xf]
      %v1864 = vld [vmem:[%s13] sm:$0x1]
      %v1866 = vlaneseq
      %v1867 = vshrl.u32 %v1866, 7
      %v1868 = vsub.s32 0, %v1867
      %v1869 = vrot.slane %v1864, %v1868
      %v1903 = vunpack.c.l.b16 %v1832
      %v1904 = vunpack.c.l.b16 %v1833
      %v1905 = vunpack.c.l.b16 %v1834
      %v1906 = vunpack.c.l.b16 %v1835
      %v1907 = vunpack.c.l.b16 %v1836
      %v1908 = vunpack.c.l.b16 %v1837
      %v1909 = vunpack.c.l.b16 %v1838
      %v1910 = vunpack.c.l.b16 %v1839
      %v1911 = vunpack.c.l.b16 %v1840
      %v1912 = vunpack.c.l.b16 %v1841
      %v1913 = vunpack.c.l.b16 %v1842
      %v1914 = vunpack.c.l.b16 %v1843
      %v1915 = vunpack.c.l.b16 %v1844
      %v1916 = vunpack.c.l.b16 %v1845
      %v1917 = vunpack.c.l.b16 %v1846
      %v1918 = vunpack.c.l.b16 %v1847
      %v1919 = vunpack.c.l.b16 %v1848
      %v1920 = vunpack.c.l.b16 %v1849
      %v1921 = vunpack.c.l.b16 %v1850
      %v1922 = vunpack.c.l.b16 %v1851
      %v1923 = vunpack.c.l.b16 %v1852
      %v1924 = vunpack.c.l.b16 %v1853
      %v1925 = vunpack.c.l.b16 %v1854
      %v1926 = vunpack.c.l.b16 %v1855
      %v1927 = vunpack.c.l.b16 %v1856
      %v1928 = vunpack.c.l.b16 %v1857
      %v1929 = vunpack.c.l.b16 %v1858
      %v1930 = vunpack.c.l.b16 %v1859
      %v1931 = vunpack.c.l.b16 %v1860
      %v1932 = vunpack.c.l.b16 %v1861
      %v1933 = vunpack.c.l.b16 %v1862
      %v1934 = vunpack.c.l.b16 %v1863
      %v1935 = vpack.c.b16 %v1904, %v1903
      %v1936 = vpack.c.b16 %v1906, %v1905
      %v1937 = vpack.c.b16 %v1908, %v1907
      %v1938 = vpack.c.b16 %v1910, %v1909
      %v1939 = vpack.c.b16 %v1912, %v1911
      %v1940 = vpack.c.b16 %v1914, %v1913
      %v1941 = vpack.c.b16 %v1916, %v1915
      %v1942 = vpack.c.b16 %v1918, %v1917
      %v1943 = vpack.c.b16 %v1920, %v1919
      %v1944 = vpack.c.b16 %v1922, %v1921
      %v1945 = vpack.c.b16 %v1924, %v1923
      %v1946 = vpack.c.b16 %v1926, %v1925
      %v1947 = vpack.c.b16 %v1928, %v1927
      %v1948 = vpack.c.b16 %v1930, %v1929
      %v1949 = vpack.c.b16 %v1932, %v1931
      %v1950 = vpack.c.b16 %v1934, %v1933
      %1967 = vmatprep.subr.bf16.mxu0 0
      %1968 = vmatpush1.bf16.msra.mxu0 %v1942
      %1969 = vmatprep.subr.bf16.mxu0 0
      %1970 = vmatpush1.bf16.msra.mxu0 %v1941
      %1971 = vmatprep.subr.bf16.mxu0 0
      %1972 = vmatpush1.bf16.msra.mxu0 %v1940
      %1973 = vmatprep.subr.bf16.mxu0 0
      %1974 = vmatpush1.bf16.msra.mxu0 %v1939
      %1975 = vmatprep.subr.bf16.mxu0 0
      %1976 = vmatpush1.bf16.msra.mxu0 %v1938
      %1977 = vmatprep.subr.bf16.mxu0 0
      %1978 = vmatpush1.bf16.msra.mxu0 %v1937
      %1979 = vmatprep.subr.bf16.mxu0 0
      %1980 = vmatpush1.bf16.msra.mxu0 %v1936
      %1981 = vmatprep.subr.bf16.mxu0 0
      %1982 = vmatpush1.bf16.msra.mxu0 %v1935
      %1983 = vmatprep.subr.bf16.mxu0 0
      %1984 = vmatpush2.bf16.msra.mxu0 %v1950
      %1985 = vmatprep.subr.bf16.mxu0 0
      %1986 = vmatpush2.bf16.msra.mxu0 %v1949
      %1987 = vmatprep.subr.bf16.mxu0 0
      %1988 = vmatpush2.bf16.msra.mxu0 %v1948
      %1989 = vmatprep.subr.bf16.mxu0 0
      %1990 = vmatpush2.bf16.msra.mxu0 %v1947
      %1991 = vmatprep.subr.bf16.mxu0 0
      %1992 = vmatpush2.bf16.msra.mxu0 %v1946
      %1993 = vmatprep.subr.bf16.mxu0 0
      %1994 = vmatpush2.bf16.msra.mxu0 %v1945
      %1995 = vmatprep.subr.bf16.mxu0 0
      %1996 = vmatpush2.bf16.msra.mxu0 %v1944
      %1997 = vmatprep.subr.bf16.mxu0 0
      %1998 = vmatpush2.bf16.msra.mxu0 %v1943
      %1999 = vmatprep.mubr.bf16.mxu0 %v1817
      %2000 = vmatmul.mubr.bf16.gmra.mxu0 %v1816
      %v2001 = vpop.f32.mrf.mxu0
      %v2002 = vadd.f32 %v1869, %v2001
      %v2003 = vpop.f32.mrf.mxu0
      %v2004 = vpop.f32.mrf.mxu0
      %v2005 = vadd.f32 %v1869, %v2004
      %v2006 = vpop.f32.mrf.mxu0
      %2007 = vmatprep.mubr.bf16.mxu0 %v1819
      %2008 = vmatmul.mubr.bf16.gmra.mxu0 %v1818
      %v2009 = vpop.f32.mrf.mxu0
      %v2010 = vadd.f32 %v1869, %v2009
      %v2011 = vpop.f32.mrf.mxu0
      %v2012 = vpop.f32.mrf.mxu0
      %v2013 = vadd.f32 %v1869, %v2012
      %v2014 = vpop.f32.mrf.mxu0
      %2015 = vmatprep.mubr.bf16.mxu0 %v1821
      %2016 = vmatmul.mubr.bf16.gmra.mxu0 %v1820
      %v2017 = vpop.f32.mrf.mxu0
      %v2018 = vadd.f32 %v1869, %v2017
      %v2019 = vpop.f32.mrf.mxu0
      %v2020 = vpop.f32.mrf.mxu0
      %v2021 = vadd.f32 %v1869, %v2020
      %v2022 = vpop.f32.mrf.mxu0
      %2023 = vmatprep.mubr.bf16.mxu0 %v1823
      %2024 = vmatmul.mubr.bf16.gmra.mxu0 %v1822
      %v2025 = vpop.f32.mrf.mxu0
      %v2026 = vadd.f32 %v1869, %v2025
      %v2027 = vpop.f32.mrf.mxu0
      %v2028 = vpop.f32.mrf.mxu0
      %v2029 = vadd.f32 %v1869, %v2028
      %v2030 = vpop.f32.mrf.mxu0
      %2031 = vmatprep.mubr.bf16.mxu0 %v1825
      %2032 = vmatmul.mubr.bf16.gmra.mxu0 %v1824
      %v2033 = vpop.f32.mrf.mxu0
      %v2034 = vadd.f32 %v1869, %v2033
      %v2035 = vpop.f32.mrf.mxu0
      %v2036 = vpop.f32.mrf.mxu0
      %v2037 = vadd.f32 %v1869, %v2036
      %v2038 = vpop.f32.mrf.mxu0
      %2039 = vmatprep.mubr.bf16.mxu0 %v1827
      %2040 = vmatmul.mubr.bf16.gmra.mxu0 %v1826
      %v2041 = vpop.f32.mrf.mxu0
      %v2042 = vadd.f32 %v1869, %v2041
      %v2043 = vpop.f32.mrf.mxu0
      %v2044 = vpop.f32.mrf.mxu0
      %v2045 = vadd.f32 %v1869, %v2044
      %v2046 = vpop.f32.mrf.mxu0
      %2047 = vmatprep.mubr.bf16.mxu0 %v1829
      %2048 = vmatmul.mubr.bf16.gmra.mxu0 %v1828
      %v2049 = vpop.f32.mrf.mxu0
      %v2050 = vadd.f32 %v1869, %v2049
      %v2051 = vpop.f32.mrf.mxu0
      %v2052 = vpop.f32.mrf.mxu0
      %v2053 = vadd.f32 %v1869, %v2052
      %v2054 = vpop.f32.mrf.mxu0
      %2055 = vmatprep.mubr.bf16.mxu0 %v1831
      %2056 = vmatmul.mubr.bf16.gmra.mxu0 %v1830
      %v2057 = vpop.f32.mrf.mxu0
      %v2058 = vadd.f32 %v1869, %v2057
      %v2059 = vpop.f32.mrf.mxu0
      %v2060 = vpop.f32.mrf.mxu0
      %v2061 = vadd.f32 %v1869, %v2060
      %v2062 = vpop.f32.mrf.mxu0
      %2063 = vdwg.mxu0
      %2064 = vst [vmem:[%s532] sm:$0xff] %v2002
      %2065 = vst [vmem:[%s532 + $0x8] sm:$0xff] %v2005
      %2066 = vst [vmem:[%s532 + $0x10] sm:$0xff] %v2010
      %2067 = vst [vmem:[%s532 + $0x18] sm:$0xff] %v2013
      %2068 = vst [vmem:[%s532 + $0x20] sm:$0xff] %v2018
      %2069 = vst [vmem:[%s532 + $0x28] sm:$0xff] %v2021
      %2070 = vst [vmem:[%s532 + $0x30] sm:$0xff] %v2026
      %2071 = vst [vmem:[%s532 + $0x38] sm:$0xff] %v2029
      %2072 = vst [vmem:[%s532 + $0x40] sm:$0xff] %v2034
      %2073 = vst [vmem:[%s532 + $0x48] sm:$0xff] %v2037
      %2074 = vst [vmem:[%s532 + $0x50] sm:$0xff] %v2042
      %2075 = vst [vmem:[%s532 + $0x58] sm:$0xff] %v2045
      %2076 = vst [vmem:[%s532 + $0x60] sm:$0xff] %v2050
      %2077 = vst [vmem:[%s532 + $0x68] sm:$0xff] %v2053
      %2078 = vst [vmem:[%s532 + $0x70] sm:$0xff] %v2058
      %2079 = vst [vmem:[%s532 + $0x78] sm:$0xff] %v2061
      %v2080 = vlaneseq
      %v2081 = vand.u32 %v2080, 127
      %vm2082 = vcmp.eq.s32.totalorder %v2081, 16
      %v2083 = vxor.u32 %v1175, 2147483648
      %v2084 = vxor.u32 %v1178, 2147483648
      %v2085 = vxor.u32 %v1183, 2147483648
      %v2086 = vxor.u32 %v1186, 2147483648
      %v2087 = vxor.u32 %v1191, 2147483648
      %v2088 = vxor.u32 %v1194, 2147483648
      %v2089 = vxor.u32 %v1199, 2147483648
      %v2090 = vxor.u32 %v1202, 2147483648
      %v2091 = vxor.u32 %v1207, 2147483648
      %v2092 = vxor.u32 %v1210, 2147483648
      %v2093 = vxor.u32 %v1215, 2147483648
      %v2094 = vxor.u32 %v1218, 2147483648
      %v2095 = vxor.u32 %v1223, 2147483648
      %v2096 = vxor.u32 %v1226, 2147483648
      %v2097 = vxor.u32 %v1231, 2147483648
      %v2098 = vxor.u32 %v1234, 2147483648
      %v2099 = vmul.f32 %v2083, 1.442695
      %v2100 = vpow.pop %v2099
      %v2101 = vmul.f32 %v2084, 1.442695
      %v2102 = vpow.pop %v2101
      %v2103 = vmul.f32 %v2085, 1.442695
      %v2104 = vpow.pop %v2103
      %v2105 = vmul.f32 %v2086, 1.442695
      %v2106 = vpow.pop %v2105
      %v2107 = vmul.f32 %v2087, 1.442695
      %v2108 = vpow.pop %v2107
      %v2109 = vmul.f32 %v2088, 1.442695
      %v2110 = vpow.pop %v2109
      %v2111 = vmul.f32 %v2089, 1.442695
      %v2112 = vpow.pop %v2111
      %v2113 = vmul.f32 %v2090, 1.442695
      %v2114 = vpow.pop %v2113
      %v2115 = vmul.f32 %v2091, 1.442695
      %v2116 = vpow.pop %v2115
      %v2117 = vmul.f32 %v2092, 1.442695
      %v2118 = vpow.pop %v2117
      %v2119 = vmul.f32 %v2093, 1.442695
      %v2120 = vpow.pop %v2119
      %v2121 = vmul.f32 %v2094, 1.442695
      %v2122 = vpow.pop %v2121
      %v2123 = vmul.f32 %v2095, 1.442695
      %v2124 = vpow.pop %v2123
      %v2125 = vmul.f32 %v2096, 1.442695
      %v2126 = vpow.pop %v2125
      %v2127 = vmul.f32 %v2097, 1.442695
      %v2128 = vpow.pop %v2127
      %v2129 = vmul.f32 %v2098, 1.442695
      %v2130 = vpow.pop %v2129
      %v2131 = vadd.f32 %v2100, 1.0
      %v2132 = vadd.f32 %v2102, 1.0
      %v2133 = vadd.f32 %v2104, 1.0
      %v2134 = vadd.f32 %v2106, 1.0
      %v2135 = vadd.f32 %v2108, 1.0
      %v2136 = vadd.f32 %v2110, 1.0
      %v2137 = vadd.f32 %v2112, 1.0
      %v2138 = vadd.f32 %v2114, 1.0
      %v2139 = vadd.f32 %v2116, 1.0
      %v2140 = vadd.f32 %v2118, 1.0
      %v2141 = vadd.f32 %v2120, 1.0
      %v2142 = vadd.f32 %v2122, 1.0
      %v2143 = vadd.f32 %v2124, 1.0
      %v2144 = vadd.f32 %v2126, 1.0
      %v2145 = vadd.f32 %v2128, 1.0
      %v2146 = vadd.f32 %v2130, 1.0
      %v2147 = vrcp.pop %v2131
      %v2148 = vmul.f32 1.0, %v2147
      %v2149 = vrcp.pop %v2132
      %v2150 = vmul.f32 1.0, %v2149
      %v2151 = vrcp.pop %v2133
      %v2152 = vmul.f32 1.0, %v2151
      %v2153 = vrcp.pop %v2134
      %v2154 = vmul.f32 1.0, %v2153
      %v2155 = vrcp.pop %v2135
      %v2156 = vmul.f32 1.0, %v2155
      %v2157 = vrcp.pop %v2136
      %v2158 = vmul.f32 1.0, %v2157
      %v2159 = vrcp.pop %v2137
      %v2160 = vmul.f32 1.0, %v2159
      %v2161 = vrcp.pop %v2138
      %v2162 = vmul.f32 1.0, %v2161
      %v2163 = vrcp.pop %v2139
      %v2164 = vmul.f32 1.0, %v2163
      %v2165 = vrcp.pop %v2140
      %v2166 = vmul.f32 1.0, %v2165
      %v2167 = vrcp.pop %v2141
      %v2168 = vmul.f32 1.0, %v2167
      %v2169 = vrcp.pop %v2142
      %v2170 = vmul.f32 1.0, %v2169
      %v2171 = vrcp.pop %v2143
      %v2172 = vmul.f32 1.0, %v2171
      %v2173 = vrcp.pop %v2144
      %v2174 = vmul.f32 1.0, %v2173
      %v2175 = vrcp.pop %v2145
      %v2176 = vmul.f32 1.0, %v2175
      %v2177 = vrcp.pop %v2146
      %v2178 = vmul.f32 1.0, %v2177
      %v2179 = vsel %vm2082, %v2148, %v1175
      %v2180 = vsel %vm2082, %v2150, %v1178
      %v2181 = vsel %vm2082, %v2152, %v1183
      %v2182 = vsel %vm2082, %v2154, %v1186
      %v2183 = vsel %vm2082, %v2156, %v1191
      %v2184 = vsel %vm2082, %v2158, %v1194
      %v2185 = vsel %vm2082, %v2160, %v1199
      %v2186 = vsel %vm2082, %v2162, %v1202
      %v2187 = vsel %vm2082, %v2164, %v1207
      %v2188 = vsel %vm2082, %v2166, %v1210
      %v2189 = vsel %vm2082, %v2168, %v1215
      %v2190 = vsel %vm2082, %v2170, %v1218
      %v2191 = vsel %vm2082, %v2172, %v1223
      %v2192 = vsel %vm2082, %v2174, %v1226
      %v2193 = vsel %vm2082, %v2176, %v1231
      %v2194 = vsel %vm2082, %v2178, %v1234
      %2195 = vst [vmem:[%s526] sm:$0xff] %v2179
      %2196 = vst [vmem:[%s526 + $0x8] sm:$0xff] %v2180
      %2197 = vst [vmem:[%s526 + $0x10] sm:$0xff] %v2181
      %2198 = vst [vmem:[%s526 + $0x18] sm:$0xff] %v2182
      %2199 = vst [vmem:[%s526 + $0x20] sm:$0xff] %v2183
      %2200 = vst [vmem:[%s526 + $0x28] sm:$0xff] %v2184
      %2201 = vst [vmem:[%s526 + $0x30] sm:$0xff] %v2185
      %2202 = vst [vmem:[%s526 + $0x38] sm:$0xff] %v2186
      %2203 = vst [vmem:[%s526 + $0x40] sm:$0xff] %v2187
      %2204 = vst [vmem:[%s526 + $0x48] sm:$0xff] %v2188
      %2205 = vst [vmem:[%s526 + $0x50] sm:$0xff] %v2189
      %2206 = vst [vmem:[%s526 + $0x58] sm:$0xff] %v2190
      %2207 = vst [vmem:[%s526 + $0x60] sm:$0xff] %v2191
      %2208 = vst [vmem:[%s526 + $0x68] sm:$0xff] %v2192
      %2209 = vst [vmem:[%s526 + $0x70] sm:$0xff] %v2193
      %2210 = vst [vmem:[%s526 + $0x78] sm:$0xff] %v2194
      %s2211 = smul.u32 16, %s27
      %p2212 = scmp.lt.s32.totalorder %s2211, 31
      %s2213 = scalar_select %p2212, %s2211, 31
      %s2214 = smul.addr %s2213, 8
      %s2215 = scalar_lea.vmem %s14, %s2214
      %s2216 = smul.u32 16, %s27
      %p2217 = scmp.lt.s32.totalorder %s2216, 31
      %s2218 = scalar_select %p2217, %s2216, 31
      %s2219 = smul.addr %s2218, 8
      %s2220 = scalar_lea.vmem %s15, %s2219
      // Predicated region
      $region77: #{vae_forward.1} parent=75 // pred_check
        %p2221 = pneg %p349
      $region78: #{vae_forward.1} parent=75 // pred_check_branch
        %2223 = sbr.rel (%p2221) target = $region80
      $region79: #{vae_forward.1} parent=75 // pred_region
        %s2224 = smul.u32 16, %s27
      $region80: #{vae_forward.1} parent=75 // pred_fallthru
        _
      // Predicated region
      $region81: #{vae_forward.1} parent=75 // pred_check
        %p2225 = pneg %p375
      $region82: #{vae_forward.1} parent=75 // pred_check_branch
        %2227 = sbr.rel (%p2225) target = $region84
      $region83: #{vae_forward.1} parent=75 // pred_region
        %s2228 = smul.u32 16, %s27
      $region84: #{vae_forward.1} parent=75 // pred_fallthru
        _
    $region76: #{vae_forward.1} parent=5 // pred_fallthru
      _
    %p2229 = scmp.le.s32.totalorder 2, %s22
    // Predicated region
    $region85: #{vae_forward.1} parent=5 // pred_check
      %p2230 = pneg %p2229
    $region86: #{vae_forward.1} parent=5 // pred_check_branch
      %2232 = sbr.rel (%p2230) target = $region88
    $region87: #{vae_forward.1} parent=5 // pred_region
      %s2233 = ssub.s32 %s22, 2
      // Predicated region
      $region89: #{vae_forward.1} parent=87 // pred_check
        %p2234 = pneg %p355
      $region90: #{vae_forward.1} parent=87 // pred_check_branch
        %2236 = sbr.rel (%p2234) target = $region92
      $region91: #{vae_forward.1} parent=87 // pred_region
        %s2237 = smul.u32 16, %s28
        %p2238 = scmp.lt.s32.totalorder %s2237, 31
        %s2239 = scalar_select %p2238, %s2237, 31
        %s2240 = smul.addr %s2239, 8
        %s2241 = scalar_lea.vmem %s14, %s2240
      $region92: #{vae_forward.1} parent=87 // pred_fallthru
        _
      // Predicated region
      $region93: #{vae_forward.1} parent=87 // pred_check
        %p2242 = pneg %p381
      $region94: #{vae_forward.1} parent=87 // pred_check_branch
        %2244 = sbr.rel (%p2242) target = $region96
      $region95: #{vae_forward.1} parent=87 // pred_region
        %s2245 = smul.u32 16, %s28
        %p2246 = scmp.lt.s32.totalorder %s2245, 31
        %s2247 = scalar_select %p2246, %s2245, 31
        %s2248 = smul.addr %s2247, 8
        %s2249 = scalar_lea.vmem %s15, %s2248
      $region96: #{vae_forward.1} parent=87 // pred_fallthru
        _
    $region88: #{vae_forward.1} parent=5 // pred_fallthru
      _
  $region6: #{vae_forward.1} parent=0 // loop_footer
    %s26 = sadd.s32 1, %s22
  $region7: #{vae_forward.1} parent=0 // loop_footer_branch
    %21 = sbr.rel target = $region3
  $region8: #{vae_forward.1} parent=0 // loop_exit
    _

</llo_original>
